<compile_context>
chip_gen: v7x
topology: tpu7x:2x2x1
jax: 0.10.0
libtpu: 0.0.40
codegen_flags: <defaults>
</compile_context>

<pallas_src>
from functools import partial

import jax
import jax.numpy as jnp
from jax.experimental import pallas as pl
from jax.experimental.pallas import tpu as pltpu


# ---------------------------------------------------------------------------
# Kernel 1: latent-query attention pooling + output projection  ->  y (B, C)
# ---------------------------------------------------------------------------
def _attn_pool_kernel(x_ref, wkv_ref, bkv_ref, qmt_ref, mt_ref,
                      wproj_ref, bproj_ref, o_ref, *, n_valid):
    TB, Np, C = x_ref.shape
    H = qmt_ref.shape[1]
    cd = wkv_ref.dtype                       # matmul compute dtype (bf16 / f32)
    f32 = jnp.float32

    # (TB, Np, C) -> (TB*Np, C): layout-free (Np padded to a sublane multiple).
    xf = x_ref[...].reshape(TB * Np, C)

    # Fused k|v projection: one wide MXU matmul, f32 accumulation, f32 bias.
    kv = jnp.dot(xf, wkv_ref[...], preferred_element_type=f32) + bkv_ref[...]
    k3 = kv[:, :C].reshape(TB, Np, C)        # lane-aligned slices of the result
    v3 = kv[:, C:].reshape(TB, Np, C)

    # Per-head logits directly in lane-dense (TB, H, Np) layout.  qmt holds
    # scale * q masked to each head's channel block, so
    #   logits[b, h, n] = scale * <q_h, k_h(b, n)>.
    # Kept in f32 (tiny matmul) for tighter parity with the reference.
    qmt = jnp.broadcast_to(qmt_ref[...], (TB, H, C))
    logits = jnp.einsum("bhc,bnc->bhn", qmt, k3,
                        preferred_element_type=f32)                # (TB, H, Np)

    if n_valid < Np:                          # static: mask zero-padded keys
        n_idx = jax.lax.broadcasted_iota(jnp.int32, (TB, H, Np), 2)
        logits = jnp.where(n_idx < n_valid, logits, -jnp.inf)

    # Lane-dense softmax over the key axis (f32; EUP reciprocal for the denom).
    mx = jnp.max(logits, axis=-1, keepdims=True)                   # (TB, H, 1)
    e = jnp.exp(logits - mx)
    attn = e * pl.reciprocal(jnp.sum(e, axis=-1, keepdims=True), approx=True)

    # Attention-weighted value reduction stays on the MXU: (TB, H, C).
    ohc = jnp.einsum("bhn,bnc->bhc", attn.astype(cd), v3.astype(cd),
                     preferred_element_type=f32)
    # Collapse heads back onto their channel blocks with the 0/1 membership
    # mask (H=8 elements -> cheap sublane reduce).
    pooled = jnp.sum(ohc * mt_ref[...], axis=1)                    # (TB, C)

    # Fused output projection (module's self.proj).
    y = jnp.dot(pooled.astype(cd), wproj_ref[...],
                preferred_element_type=f32) + bproj_ref[...]
    o_ref[...] = y.astype(o_ref.dtype)
    # TODO(synk): chunk Np inside the kernel (online softmax) for very long
    # sequences on v7x instead of only shrinking the batch tile.


# ---------------------------------------------------------------------------
# Kernel 2: residual MLP on pooled features.  Single batch tile of all B rows;
# grid = (hidden tiles,) so wfc1/wfc2 stream from HBM exactly once.
# ---------------------------------------------------------------------------
def _mlp_kernel(y_ref, wfc1_ref, bfc1_ref, wfc2_ref, bfc2_ref, out_ref, acc_scr):
    cd = wfc1_ref.dtype
    j = pl.program_id(0)

    @pl.when(j == 0)
    def _():
        acc_scr[...] = jnp.zeros_like(acc_scr)

    h = jnp.dot(y_ref[...].astype(cd), wfc1_ref[...],
                preferred_element_type=jnp.float32) + bfc1_ref[...]
    h = jax.nn.gelu(h, approximate=False)          # exact GELU (nn.GELU default)
    acc_scr[...] += jnp.dot(h.astype(cd), wfc2_ref[...],
                            preferred_element_type=jnp.float32)

    @pl.when(j == pl.num_programs(0) - 1)
    def _():
        out_ref[...] = (y_ref[...] + acc_scr[...]
                        + bfc2_ref[...]).astype(out_ref.dtype)


# ---------------------------------------------------------------------------
# VMEM budgeting (blocks + in-kernel temporaries) and tile selection
# ---------------------------------------------------------------------------
def _vmem_capacity_bytes():
    try:
        cap = getattr(pltpu.get_tpu_info(), "vmem_capacity_bytes", None)
        if cap:
            return int(cap)           # 128 MiB on v5e/v6e, 64 MiB per-core v7x
    except Exception:
        pass
    return 64 << 20                   # conservative fallback (v7x-safe)


def _k1_vmem_bytes(TB, Np, C, H, cd_b):
    rows = TB * Np
    blocks = (2 * rows * C * cd_b                 # x block (double-buffered)
              + 2 * 3 * C * C * cd_b              # wkv (C,2C) + wproj (C,C)
              + 2 * (3 * C + 2 * H * C) * 4       # bkv, bproj, qmt, mt
              + 2 * TB * C * 4)                   # output block
    temps = (rows * 2 * C * 4                     # kv (f32)
             + rows * C * cd_b                    # v cast for the value matmul
             + 2 * TB * H * C * 4                 # broadcast q + ohc
             + 3 * TB * H * Np * 4)               # logits / exp / attn
    return blocks + temps


def _k2_vmem_bytes(B, C, ht, cd_b, out_b):
    return (2 * B * C * 4                         # y block
            + 2 * 2 * C * ht * cd_b               # wfc1 / wfc2 tiles
            + 2 * (ht + C) * 4                    # bias tiles
            + 2 * B * C * out_b                   # output block
            + B * C * 4                           # accumulator scratch
            + 2 * B * ht * 4)                     # hidden / GELU temporaries
    # TODO(synk): mark grid-invariant weight blocks with pl.Buffered(1) (or a
    # once-loaded scratch copy) to drop the 2x double-buffer factor above.


def _pick_batch_tile(B, Np, C, H, cd_b, budget):
    for d in range(B, 0, -1):
        if B % d:
            continue
        if B >= 2 and B // d < 2:
            continue        # keep >=2 steps on the parallel axis (v7x: 2 TCs)
        if _k1_vmem_bytes(d, Np, C, H, cd_b) <= budget:
            return d
    return 1


def _pick_hidden_tile(hidden, B, C, cd_b, out_b, budget):
    cands = [hidden] + [t for t in (4096, 2048, 1024, 512, 256, 128)
                        if t < hidden and hidden % t == 0]
    for t in cands:
        if _k2_vmem_bytes(B, C, t, cd_b, out_b) <= budget:
            return t
    return cands[-1]


# ---------------------------------------------------------------------------
# Wrapper
# ---------------------------------------------------------------------------
def attention_pool_latent(x, params, num_heads, *,
                          compute_dtype=jnp.bfloat16,
                          batch_tile=None, hidden_tile=None):
    B, N, C = x.shape
    assert C % num_heads == 0
    head_dim = C // num_heads
    scale = head_dim ** -0.5
    latent = params["latent"]
    assert latent.shape[1] == 1, "kernel specialized to latent_len == 1 (module default)"
    hidden = params["wfc1"].shape[1]

    f32 = jnp.float32
    cd = jnp.dtype(compute_dtype)
    cd_b = cd.itemsize
    out_b = jnp.dtype(x.dtype).itemsize

    cap = _vmem_capacity_bytes()
    budget = cap - max(16 << 20, cap // 5)            # tile-selection budget
    vmem_limit = int(max(32 << 20, cap - (8 << 20)))  # scoped VMEM limit

    # Pad tokens so the in-kernel (TB, N, C) -> (TB*N, C) merge is layout-free.
    pad_to = 8 * 4 // cd_b            # 8 rows (f32) / 16 rows (bf16)
    Np = ((N + pad_to - 1) // pad_to) * pad_to
    xc = x.astype(cd)
    if Np != N:
        xc = jnp.pad(xc, ((0, 0), (0, Np - N), (0, 0)))

    if batch_tile is None:
        batch_tile = _pick_batch_tile(B, Np, C, num_heads, cd_b, budget)
    assert B % batch_tile == 0
    if hidden_tile is None:
        hidden_tile = _pick_hidden_tile(hidden, B, C, cd_b, out_b, budget)
    assert hidden % hidden_tile == 0

    # ---- hoisted, batch-invariant precompute (tiny, plain XLA) -------------
    # q = latent @ Wq + bq is identical for every batch element; fold the
    # 1/sqrt(head_dim) scale in and mask it per head (kept in f32 for parity).
    q = (latent[0].astype(f32) @ params["wq"].astype(f32)
         + params["bq"].astype(f32)) * scale                          # (1, C)
    member = ((jnp.arange(C) // head_dim)[None, :]
              == jnp.arange(num_heads)[:, None])                      # (H, C)
    qmt = jnp.where(member, q, 0.0).astype(f32)[None]                 # (1, H, C)
    mt = member.astype(f32)[None]                                     # (1, H, C)

    wkv = jnp.concatenate([params["wk"], params["wv"]], axis=1).astype(cd)   # (C, 2C)
    bkv = jnp.concatenate([params["bk"], params["bv"]], axis=1).astype(f32)  # (1, 2C)
    wproj = params["wproj"].astype(cd)
    bproj = params["bproj"].astype(f32)

    # ---- kernel 1: attention pooling + output projection --------------------
    pooled = pl.pallas_call(
        partial(_attn_pool_kernel, n_valid=N),
        out_shape=jax.ShapeDtypeStruct((B, C), f32),
        grid=(B // batch_tile,),
        in_specs=[
            pl.BlockSpec((batch_tile, Np, C), lambda i: (i, 0, 0)),   # x tile
            pl.BlockSpec((C, 2 * C), lambda i: (0, 0)),               # wkv
            pl.BlockSpec((1, 2 * C), lambda i: (0, 0)),               # bkv
            pl.BlockSpec((1, num_heads, C), lambda i: (0, 0, 0)),     # scale*q per head
            pl.BlockSpec((1, num_heads, C), lambda i: (0, 0, 0)),     # head membership
            pl.BlockSpec((C, C), lambda i: (0, 0)),                   # wproj
            pl.BlockSpec((1, C), lambda i: (0, 0)),                   # bproj
        ],
        out_specs=pl.BlockSpec((batch_tile, C), lambda i: (i, 0)),
        compiler_params=pltpu.CompilerParams(
            dimension_semantics=("parallel",),
            vmem_limit_bytes=vmem_limit),
    )(xc, wkv, bkv, qmt, mt, wproj, bproj)

    # ---- kernel 2: residual MLP ---------------------------------------------
    wfc1 = params["wfc1"].astype(cd)
    bfc1 = params["bfc1"].astype(f32)
    wfc2 = params["wfc2"].astype(cd)
    bfc2 = params["bfc2"].astype(f32)

    out = pl.pallas_call(
        _mlp_kernel,
        out_shape=jax.ShapeDtypeStruct((B, C), x.dtype),
        grid=(hidden // hidden_tile,),
        in_specs=[
            pl.BlockSpec((B, C), lambda j: (0, 0)),                   # pooled y
            pl.BlockSpec((C, hidden_tile), lambda j: (0, j)),         # wfc1 tile
            pl.BlockSpec((1, hidden_tile), lambda j: (0, j)),         # bfc1 tile
            pl.BlockSpec((hidden_tile, C), lambda j: (j, 0)),         # wfc2 tile
            pl.BlockSpec((1, C), lambda j: (0, 0)),                   # bfc2
        ],
        out_specs=pl.BlockSpec((B, C), lambda j: (0, 0)),
        scratch_shapes=[pltpu.VMEM((B, C), jnp.float32)],             # accumulator
        compiler_params=pltpu.CompilerParams(
            dimension_semantics=("arbitrary",),
            vmem_limit_bytes=vmem_limit),
    )(pooled, wfc1, bfc1, wfc2, bfc2)

    return out   # (B, C): pool_type='token' with latent_len == 1


# ---------------------------------------------------------------------------
# Synthetic params + plain-JAX reference
# ---------------------------------------------------------------------------
def init_params(key, C, num_heads, mlp_ratio=4.0, latent_len=1, dtype=jnp.float32):
    hidden = int(C * mlp_ratio)
    ks = jax.random.split(key, 12)

    def lin_w(k, fan_in, fan_out):
        return jax.random.normal(k, (fan_in, fan_out), dtype) * (fan_in ** -0.5)

    return dict(
        latent=jax.random.normal(ks[0], (1, latent_len, C), dtype) * (C ** -0.5),
        wq=lin_w(ks[1], C, C),     bq=jax.random.normal(ks[2], (1, C), dtype) * 0.02,
        wk=lin_w(ks[3], C, C),     bk=jax.random.normal(ks[4], (1, C), dtype) * 0.02,
        wv=lin_w(ks[5], C, C),     bv=jax.random.normal(ks[6], (1, C), dtype) * 0.02,
        wproj=lin_w(ks[7], C, C),  bproj=jnp.zeros((1, C), dtype),
        wfc1=lin_w(ks[8], C, hidden),  bfc1=jax.random.normal(ks[9], (1, hidden), dtype) * 0.02,
        wfc2=lin_w(ks[10], hidden, C), bfc2=jax.random.normal(ks[11], (1, C), dtype) * 0.02,
    )


def ref_forward(x, p, num_heads):
    """Plain-JAX reference mirroring the PyTorch forward exactly (f32)."""
    B, N, C = x.shape
    hd = C // num_heads
    q = jnp.broadcast_to(p["latent"], (B, 1, C)) @ p["wq"] + p["bq"]
    k = x @ p["wk"] + p["bk"]
    v = x @ p["wv"] + p["bv"]
    qh = q.reshape(B, 1, num_heads, hd).transpose(0, 2, 1, 3)
    kh = k.reshape(B, N, num_heads, hd).transpose(0, 2, 1, 3)
    vh = v.reshape(B, N, num_heads, hd).transpose(0, 2, 1, 3)
    attn = jax.nn.softmax(
        jnp.einsum("bhld,bhnd->bhln", qh, kh) * (hd ** -0.5), axis=-1)
    o = jnp.einsum("bhln,bhnd->bhld", attn, vh).transpose(0, 2, 1, 3).reshape(B, 1, C)
    y = o @ p["wproj"] + p["bproj"]
    h = jax.nn.gelu(y @ p["wfc1"] + p["bfc1"], approximate=False)
    y = y + h @ p["wfc2"] + p["bfc2"]
    return y[:, 0]


if __name__ == "__main__":
    # Small but tile-friendly shapes: batch=16, tokens=16, channels=64, heads=8
    # (head_dim=8), MLP hidden=256 -> 2 parallel batch steps in kernel 1 and a
    # single hidden tile in kernel 2.
    B, N, C, H = 16, 16, 64, 8
    key = jax.random.PRNGKey(0)
    kx, kp = jax.random.split(key)
    x = jax.random.normal(kx, (B, N, C), jnp.float32)
    params = init_params(kp, C, H)

    ref = jax.block_until_ready(ref_forward(x, params, H))

    # f32 compute path: matches module numerics (approx-reciprocal softmax
    # denominator is the only deviation).
    out_f32 = jax.block_until_ready(
        attention_pool_latent(x, params, H, compute_dtype=jnp.float32))
    assert out_f32.shape == (B, C), out_f32.shape
    err32 = float(jnp.max(jnp.abs(out_f32 - ref)))
    assert jnp.allclose(out_f32, ref, atol=1e-2, rtol=1e-2), err32

    # bf16 matmul operands with f32 accumulation (recommended fast path).
    out_bf16 = jax.block_until_ready(
        attention_pool_latent(x, params, H, compute_dtype=jnp.bfloat16))
    errbf = float(jnp.max(jnp.abs(out_bf16 - ref)))
    assert jnp.allclose(out_bf16, ref, atol=1e-1, rtol=1e-1), errbf

    print("KERNEL_OK")
</pallas_src>

<mosaic_0001>
module attributes {stable_mosaic.version = 11 : i64} {
  func.func @_attn_pool_kernel(%arg0: i32, %arg1: memref<8x16x64xf32, #tpu.memory_space<vmem>>, %arg2: memref<64x128xf32, #tpu.memory_space<vmem>>, %arg3: memref<1x128xf32, #tpu.memory_space<vmem>>, %arg4: memref<1x8x64xf32, #tpu.memory_space<vmem>>, %arg5: memref<1x8x64xf32, #tpu.memory_space<vmem>>, %arg6: memref<64x64xf32, #tpu.memory_space<vmem>>, %arg7: memref<1x64xf32, #tpu.memory_space<vmem>>, %arg8: memref<8x64xf32, #tpu.memory_space<vmem>>) attributes {dimension_semantics = [#tpu.dimension_semantics<parallel>], iteration_bounds = array<i64: 2>, scalar_prefetch = 0 : i64, scratch_operands = 0 : i64, tpu.core_type = #tpu.core_type<tc>, window_params = [{transform_indices = @transform_0, window_bounds = array<i64: 8, 16, 64>}, {pipeline_mode = #tpu.pipeline_mode<synchronous>, transform_indices = @transform_1, window_bounds = array<i64: 64, 128>}, {pipeline_mode = #tpu.pipeline_mode<synchronous>, transform_indices = @transform_2, window_bounds = array<i64: 1, 128>}, {pipeline_mode = #tpu.pipeline_mode<synchronous>, transform_indices = @transform_3, window_bounds = array<i64: 1, 8, 64>}, {pipeline_mode = #tpu.pipeline_mode<synchronous>, transform_indices = @transform_4, window_bounds = array<i64: 1, 8, 64>}, {pipeline_mode = #tpu.pipeline_mode<synchronous>, transform_indices = @transform_5, window_bounds = array<i64: 64, 64>}, {pipeline_mode = #tpu.pipeline_mode<synchronous>, transform_indices = @transform_6, window_bounds = array<i64: 1, 64>}, {transform_indices = @transform_7, window_bounds = array<i64: 8, 64>}]} {
    %c0 = arith.constant 0 : index
    %c0_0 = arith.constant 0 : index
    %c0_1 = arith.constant 0 : index
    %0 = vector.load %arg1[%c0, %c0_0, %c0_1] : memref<8x16x64xf32, #tpu.memory_space<vmem>>, vector<8x16x64xf32>
    %1 = vector.shape_cast %0 : vector<8x16x64xf32> to vector<128x64xf32>
    %c0_2 = arith.constant 0 : index
    %c0_3 = arith.constant 0 : index
    %2 = vector.load %arg2[%c0_2, %c0_3] : memref<64x128xf32, #tpu.memory_space<vmem>>, vector<64x128xf32>
    %cst = arith.constant dense<0.000000e+00> : vector<128x128xf32>
    %3 = tpu.matmul %1, %2, %cst {dimension_numbers = #tpu.dot_dimension_numbers<[1], [0], [0], [1], [0, 0, 1, 1], [], []>} : vector<128x64xf32>, vector<64x128xf32>, vector<128x128xf32> -> vector<128x128xf32>
    %c0_4 = arith.constant 0 : index
    %c0_5 = arith.constant 0 : index
    %4 = vector.load %arg3[%c0_4, %c0_5] : memref<1x128xf32, #tpu.memory_space<vmem>>, vector<1x128xf32>
    %5 = vector.broadcast %4 : vector<1x128xf32> to vector<128x128xf32>
    %6 = arith.addf %3, %5 : vector<128x128xf32>
    %7 = vector.extract_strided_slice %6 {offsets = [0, 0], sizes = [128, 64], strides = [1, 1]} : vector<128x128xf32> to vector<128x64xf32>
    %8 = vector.shape_cast %7 : vector<128x64xf32> to vector<8x16x64xf32>
    %9 = vector.extract_strided_slice %6 {offsets = [0, 64], sizes = [128, 64], strides = [1, 1]} : vector<128x128xf32> to vector<128x64xf32>
    %10 = vector.shape_cast %9 : vector<128x64xf32> to vector<8x16x64xf32>
    %c0_6 = arith.constant 0 : index
    %c0_7 = arith.constant 0 : index
    %c0_8 = arith.constant 0 : index
    %11 = vector.load %arg4[%c0_6, %c0_7, %c0_8] : memref<1x8x64xf32, #tpu.memory_space<vmem>>, vector<1x8x64xf32>
    %12 = vector.shape_cast %11 : vector<1x8x64xf32> to vector<1x8x64xf32>
    %13 = vector.broadcast %12 : vector<1x8x64xf32> to vector<8x8x64xf32>
    "tpu.trace_start"() <{level = 10 : i32, message = "bhc,bnc->bhn"}> : () -> ()
    %cst_9 = arith.constant dense<0.000000e+00> : vector<8x8x16xf32>
    %14 = tpu.matmul %13, %8, %cst_9 {dimension_numbers = #tpu.dot_dimension_numbers<[2], [2], [1], [1], [0, 0, 0, 1, 1, 1], [0], [0]>} : vector<8x8x64xf32>, vector<8x16x64xf32>, vector<8x8x16xf32> -> vector<8x8x16xf32>
    "tpu.trace_stop"() : () -> ()
    %cst_10 = arith.constant dense<0xFF800000> : vector<8x8xf32>
    %15 = vector.multi_reduction <maximumf>, %14, %cst_10 [2] : vector<8x8x16xf32> to vector<8x8xf32>
    %16 = vector.shape_cast %15 : vector<8x8xf32> to vector<8x8x1xf32>
    %17 = vector.broadcast %16 : vector<8x8x1xf32> to vector<8x8x16xf32>
    %18 = arith.subf %14, %17 : vector<8x8x16xf32>
    %19 = math.exp %18 : vector<8x8x16xf32>
    %cst_11 = arith.constant dense<0.000000e+00> : vector<8x8xf32>
    %20 = vector.multi_reduction <add>, %19, %cst_11 [2] : vector<8x8x16xf32> to vector<8x8xf32>
    %21 = vector.shape_cast %20 : vector<8x8xf32> to vector<8x8x1xf32>
    %22 = tpu.reciprocal %21 {approx = true} : vector<8x8x1xf32> -> vector<8x8x1xf32>
    %23 = vector.broadcast %22 : vector<8x8x1xf32> to vector<8x8x16xf32>
    %24 = arith.mulf %19, %23 : vector<8x8x16xf32>
    "tpu.trace_start"() <{level = 10 : i32, message = "bhn,bnc->bhc"}> : () -> ()
    %cst_12 = arith.constant dense<0.000000e+00> : vector<8x8x64xf32>
    %25 = tpu.matmul %24, %10, %cst_12 {dimension_numbers = #tpu.dot_dimension_numbers<[2], [1], [1], [2], [0, 0, 0, 1, 1, 2], [0], [0]>} : vector<8x8x16xf32>, vector<8x16x64xf32>, vector<8x8x64xf32> -> vector<8x8x64xf32>
    "tpu.trace_stop"() : () -> ()
    %c0_13 = arith.constant 0 : index
    %c0_14 = arith.constant 0 : index
    %c0_15 = arith.constant 0 : index
    %26 = vector.load %arg5[%c0_13, %c0_14, %c0_15] : memref<1x8x64xf32, #tpu.memory_space<vmem>>, vector<1x8x64xf32>
    %27 = vector.broadcast %26 : vector<1x8x64xf32> to vector<8x8x64xf32>
    %28 = arith.mulf %25, %27 : vector<8x8x64xf32>
    %cst_16 = arith.constant dense<0.000000e+00> : vector<8x64xf32>
    %29 = vector.multi_reduction <add>, %28, %cst_16 [1] : vector<8x8x64xf32> to vector<8x64xf32>
    %c0_17 = arith.constant 0 : index
    %c0_18 = arith.constant 0 : index
    %30 = vector.load %arg6[%c0_17, %c0_18] : memref<64x64xf32, #tpu.memory_space<vmem>>, vector<64x64xf32>
    %cst_19 = arith.constant dense<0.000000e+00> : vector<8x64xf32>
    %31 = tpu.matmul %29, %30, %cst_19 {dimension_numbers = #tpu.dot_dimension_numbers<[1], [0], [0], [1], [0, 0, 1, 1], [], []>} : vector<8x64xf32>, vector<64x64xf32>, vector<8x64xf32> -> vector<8x64xf32>
    %c0_20 = arith.constant 0 : index
    %c0_21 = arith.constant 0 : index
    %32 = vector.load %arg7[%c0_20, %c0_21] : memref<1x64xf32, #tpu.memory_space<vmem>>, vector<1x64xf32>
    %33 = vector.broadcast %32 : vector<1x64xf32> to vector<8x64xf32>
    %34 = arith.addf %31, %33 : vector<8x64xf32>
    %c0_22 = arith.constant 0 : index
    %c0_23 = arith.constant 0 : index
    %35 = vector.load %arg8[%c0_22, %c0_23] : memref<8x64xf32, #tpu.memory_space<vmem>>, vector<8x64xf32>
    tpu.vector_store %arg8[%c0_22, %c0_23], %34 {strides = array<i32>} : memref<8x64xf32, #tpu.memory_space<vmem>>, vector<8x64xf32>,
    return
  }
  func.func @transform_0(%arg0: i32) -> (i32, i32, i32) {
    %c0_i32 = arith.constant 0 : i32
    %c0_i32_0 = arith.constant 0 : i32
    %c0_i32_1 = arith.constant 0 : i32
    return %arg0, %c0_i32, %c0_i32_0 : i32, i32, i32
  }
  func.func @transform_1(%arg0: i32) -> (i32, i32) {
    %c0_i32 = arith.constant 0 : i32
    %c0_i32_0 = arith.constant 0 : i32
    %c0_i32_1 = arith.constant 0 : i32
    return %c0_i32, %c0_i32_0 : i32, i32
  }
  func.func @transform_2(%arg0: i32) -> (i32, i32) {
    %c0_i32 = arith.constant 0 : i32
    %c0_i32_0 = arith.constant 0 : i32
    %c0_i32_1 = arith.constant 0 : i32
    return %c0_i32, %c0_i32_0 : i32, i32
  }
  func.func @transform_3(%arg0: i32) -> (i32, i32, i32) {
    %c0_i32 = arith.constant 0 : i32
    %c0_i32_0 = arith.constant 0 : i32
    %c0_i32_1 = arith.constant 0 : i32
    %c0_i32_2 = arith.constant 0 : i32
    return %c0_i32, %c0_i32_0, %c0_i32_1 : i32, i32, i32
  }
  func.func @transform_4(%arg0: i32) -> (i32, i32, i32) {
    %c0_i32 = arith.constant 0 : i32
    %c0_i32_0 = arith.constant 0 : i32
    %c0_i32_1 = arith.constant 0 : i32
    %c0_i32_2 = arith.constant 0 : i32
    return %c0_i32, %c0_i32_0, %c0_i32_1 : i32, i32, i32
  }
  func.func @transform_5(%arg0: i32) -> (i32, i32) {
    %c0_i32 = arith.constant 0 : i32
    %c0_i32_0 = arith.constant 0 : i32
    %c0_i32_1 = arith.constant 0 : i32
    return %c0_i32, %c0_i32_0 : i32, i32
  }
  func.func @transform_6(%arg0: i32) -> (i32, i32) {
    %c0_i32 = arith.constant 0 : i32
    %c0_i32_0 = arith.constant 0 : i32
    %c0_i32_1 = arith.constant 0 : i32
    return %c0_i32, %c0_i32_0 : i32, i32
  }
  func.func @transform_7(%arg0: i32) -> (i32, i32) {
    %c0_i32 = arith.constant 0 : i32
    %c0_i32_0 = arith.constant 0 : i32
    return %arg0, %c0_i32 : i32, i32
  }
}

</mosaic_0001>

<llo_original>
// kernel: tpu_custom_call.1
$region0: #{tpu_custom_call.1}
  #allocation0 [shape = 'u32[]', space=smem, size = 0x4, offset = 0x4, fixed_abs, tag = 'smem constant byte address 0x4 - core index']
  #allocation1 [shape = 'u32[144,128]{1,0:T(1,128)}', space=vmem, size = 0x12000, scoped, tag = 'internal scratch']
  %s0 = inlined_call_operand.hbm [shape: f32[16,16,64], index: 0, kind: input, shape index: {}]
  %s1 = inlined_call_operand.hbm [shape: f32[64,128], index: 1, kind: input, shape index: {}]
  %s2 = inlined_call_operand.vmem [shape: f32[1,128], index: 2, kind: input, shape index: {}]
  %s3 = inlined_call_operand.vmem [shape: f32[1,8,64], index: 3, kind: input, shape index: {}]
  %s4 = inlined_call_operand.hbm [shape: f32[1,8,64], index: 4, kind: input, shape index: {}]
  %s5 = inlined_call_operand.hbm [shape: f32[64,64], index: 5, kind: input, shape index: {}]
  %s6 = inlined_call_operand.vmem [shape: f32[1,64], index: 6, kind: input, shape index: {}]
  %s7 = inlined_call_operand.hbm [shape: f32[16,64], index: 7, kind: output, shape index: {}]
  %s8 = sld [smem:[#allocation0]]
  $region77: #{tpu_custom_call.1} parent=0
    _
  %s10 = ssub.s32 1, %s8
  %s11 = scalar_select 0, %s10, %s8
  $region1: #{tpu_custom_call.1} parent=0
    #allocation2 [shape = 'u8[131072]{0}', space=vmem, size = 0x20000, scoped, tag = 'input window, operand 0']
    #allocation3 [shape = 's32[2]{0}', space=sflag, size = 0x8, scoped, tag = 'scoped memory for tpu_custom_call.1']
    #allocation4 [shape = 's32[2]{0}', space=sflag, size = 0x8, scoped, tag = 'scoped memory for tpu_custom_call.1']
    #allocation5 [shape = 'u8[32768]{0}', space=vmem, size = 0x8000, scoped, tag = 'input window, operand 1, single buffered']
    #allocation6 [shape = 's32[1]{0}', space=sflag, size = 0x4, scoped, tag = 'scoped memory for tpu_custom_call.1']
    #allocation7 [shape = 'u8[4096]{0}', space=vmem, size = 0x1000, scoped, tag = 'input window, operand 4, single buffered']
    #allocation8 [shape = 'u8[32768]{0}', space=vmem, size = 0x8000, scoped, tag = 'input window, operand 5, single buffered']
    #allocation9 [shape = 's32[1]{0}', space=sflag, size = 0x4, scoped, tag = 'scoped memory for tpu_custom_call.1']
    #allocation10 [shape = 'u8[8192]{0}', space=vmem, size = 0x2000, scoped, tag = 'output window, operand 0']
    %12 = vsyncpa [#allocation3], 0
    %s13 = scalar_lea.sflag [#allocation3], 1
    %14 = vsyncpa %s13, 0
    %15 = vsyncpa [#allocation6], 0
    %16 = vsyncpa [#allocation9], 0
    %17 = vsyncpa [#allocation4], 0
    %s18 = scalar_lea.sflag [#allocation4], 1
    %19 = vsyncpa %s18, 0
    loop: start=0, step=1, limit=4
    $region2: #{tpu_custom_call.1} parent=1 // loop_pre_header
      _
    $region3: #{tpu_custom_call.1} parent=1 // loop_header
      %s21 = sphi 0, %s25
      %p22 = scmp.ge.s32.totalorder %s21, 4
      %s31 = sphi 0, %s33
      %s34 = sphi 0, %s31
      %s35 = sphi 0, %s34
      %s51 = sphi 0, %s35
      %s55 = sphi 0, %s55
      %s57 = sphi 0, %s55
      %s58 = sphi 0, %s57
      %s72 = sphi 0, %s58
      %s76 = sphi 0, %s76
      %s78 = sphi 0, %s76
      %s79 = sphi 0, %s78
      %s93 = sphi 0, %s79
      %s97 = sphi 0, %s97
      %s99 = sphi 0, %s97
      %s100 = sphi 0, %s99
      %s114 = sphi 0, %s100
      %s118 = sphi 0, %s118
      %s120 = sphi 0, %s118
      %s121 = sphi 0, %s120
      %s135 = sphi 0, %s121
      %s139 = sphi 0, %s139
      %s141 = sphi 0, %s139
      %s142 = sphi 0, %s141
      %s156 = sphi 0, %s142
      %s160 = sphi 0, %s160
      %s162 = sphi 0, %s160
      %s163 = sphi 0, %s162
      %s177 = sphi 0, %s163
      %s183 = sphi 0, %s185
      %s186 = sphi 0, %s183
      %s187 = sphi 0, %s186
      %s203 = sphi 0, %s187
    $region4: #{tpu_custom_call.1} parent=1 // loop_header_branch
      %24 = sbr.rel (%p22) target = $region8
    $region5: #{tpu_custom_call.1} parent=1 // loop_body
      %s26 = ssub.s32 %s21, 1
      %s27 = ssub.s32 %s21, 2
      %s28 = sadd.s32 %s21, 1
      %s29 = ssub.s32 %s21, %s28
      %p30 = scmp.eq.s32.totalorder %s29, 0
      %s32 = sadd.s32 %s31, 1
      %s33 = scalar_select %p30, %s31, %s32
      %p36 = pneg %p30
      %p37 = scmp.eq.s32.totalorder %s21, 1
      %p38 = por %p36, %p37
      %p39 = scmp.ne.s32.totalorder %s31, %s34
      %p40 = scmp.eq.s32.totalorder %s21, 0
      %p41 = por %p39, %p40
      %p42 = scmp.ne.s32.totalorder %s31, %s34
      %p43 = scmp.eq.s32.totalorder %s26, 1
      %p44 = por %p42, %p43
      %p45 = scmp.ne.s32.totalorder %s34, %s35
      %p46 = scmp.eq.s32.totalorder %s26, 0
      %p47 = por %p45, %p46
      %p48 = scmp.ne.s32.totalorder %s34, %s35
      %p49 = scmp.eq.s32.totalorder %s27, 1
      %p50 = por %p48, %p49
      %p52 = scmp.ne.s32.totalorder %s35, %s51
      %p53 = scmp.eq.s32.totalorder %s27, 0
      %p54 = por %p52, %p53
      %s56 = sadd.s32 %s55, 1
      %p59 = scmp.eq.s32.totalorder %s21, 1
      %p60 = scmp.ne.s32.totalorder %s55, %s57
      %p61 = scmp.eq.s32.totalorder %s21, 0
      %p62 = por %p60, %p61
      %p63 = scmp.ne.s32.totalorder %s55, %s57
      %p64 = scmp.eq.s32.totalorder %s26, 1
      %p65 = por %p63, %p64
      %p66 = scmp.ne.s32.totalorder %s57, %s58
      %p67 = scmp.eq.s32.totalorder %s26, 0
      %p68 = por %p66, %p67
      %p69 = scmp.ne.s32.totalorder %s57, %s58
      %p70 = scmp.eq.s32.totalorder %s27, 1
      %p71 = por %p69, %p70
      %p73 = scmp.ne.s32.totalorder %s58, %s72
      %p74 = scmp.eq.s32.totalorder %s27, 0
      %p75 = por %p73, %p74
      %s77 = sadd.s32 %s76, 1
      %p80 = scmp.eq.s32.totalorder %s21, 1
      %p81 = scmp.ne.s32.totalorder %s76, %s78
      %p82 = scmp.eq.s32.totalorder %s21, 0
      %p83 = por %p81, %p82
      %p84 = scmp.ne.s32.totalorder %s76, %s78
      %p85 = scmp.eq.s32.totalorder %s26, 1
      %p86 = por %p84, %p85
      %p87 = scmp.ne.s32.totalorder %s78, %s79
      %p88 = scmp.eq.s32.totalorder %s26, 0
      %p89 = por %p87, %p88
      %p90 = scmp.ne.s32.totalorder %s78, %s79
      %p91 = scmp.eq.s32.totalorder %s27, 1
      %p92 = por %p90, %p91
      %p94 = scmp.ne.s32.totalorder %s79, %s93
      %p95 = scmp.eq.s32.totalorder %s27, 0
      %p96 = por %p94, %p95
      %s98 = sadd.s32 %s97, 1
      %p101 = scmp.eq.s32.totalorder %s21, 1
      %p102 = scmp.ne.s32.totalorder %s97, %s99
      %p103 = scmp.eq.s32.totalorder %s21, 0
      %p104 = por %p102, %p103
      %p105 = scmp.ne.s32.totalorder %s97, %s99
      %p106 = scmp.eq.s32.totalorder %s26, 1
      %p107 = por %p105, %p106
      %p108 = scmp.ne.s32.totalorder %s99, %s100
      %p109 = scmp.eq.s32.totalorder %s26, 0
      %p110 = por %p108, %p109
      %p111 = scmp.ne.s32.totalorder %s99, %s100
      %p112 = scmp.eq.s32.totalorder %s27, 1
      %p113 = por %p111, %p112
      %p115 = scmp.ne.s32.totalorder %s100, %s114
      %p116 = scmp.eq.s32.totalorder %s27, 0
      %p117 = por %p115, %p116
      %s119 = sadd.s32 %s118, 1
      %p122 = scmp.eq.s32.totalorder %s21, 1
      %p123 = scmp.ne.s32.totalorder %s118, %s120
      %p124 = scmp.eq.s32.totalorder %s21, 0
      %p125 = por %p123, %p124
      %p126 = scmp.ne.s32.totalorder %s118, %s120
      %p127 = scmp.eq.s32.totalorder %s26, 1
      %p128 = por %p126, %p127
      %p129 = scmp.ne.s32.totalorder %s120, %s121
      %p130 = scmp.eq.s32.totalorder %s26, 0
      %p131 = por %p129, %p130
      %p132 = scmp.ne.s32.totalorder %s120, %s121
      %p133 = scmp.eq.s32.totalorder %s27, 1
      %p134 = por %p132, %p133
      %p136 = scmp.ne.s32.totalorder %s121, %s135
      %p137 = scmp.eq.s32.totalorder %s27, 0
      %p138 = por %p136, %p137
      %s140 = sadd.s32 %s139, 1
      %p143 = scmp.eq.s32.totalorder %s21, 1
      %p144 = scmp.ne.s32.totalorder %s139, %s141
      %p145 = scmp.eq.s32.totalorder %s21, 0
      %p146 = por %p144, %p145
      %p147 = scmp.ne.s32.totalorder %s139, %s141
      %p148 = scmp.eq.s32.totalorder %s26, 1
      %p149 = por %p147, %p148
      %p150 = scmp.ne.s32.totalorder %s141, %s142
      %p151 = scmp.eq.s32.totalorder %s26, 0
      %p152 = por %p150, %p151
      %p153 = scmp.ne.s32.totalorder %s141, %s142
      %p154 = scmp.eq.s32.totalorder %s27, 1
      %p155 = por %p153, %p154
      %p157 = scmp.ne.s32.totalorder %s142, %s156
      %p158 = scmp.eq.s32.totalorder %s27, 0
      %p159 = por %p157, %p158
      %s161 = sadd.s32 %s160, 1
      %p164 = scmp.eq.s32.totalorder %s21, 1
      %p165 = scmp.ne.s32.totalorder %s160, %s162
      %p166 = scmp.eq.s32.totalorder %s21, 0
      %p167 = por %p165, %p166
      %p168 = scmp.ne.s32.totalorder %s160, %s162
      %p169 = scmp.eq.s32.totalorder %s26, 1
      %p170 = por %p168, %p169
      %p171 = scmp.ne.s32.totalorder %s162, %s163
      %p172 = scmp.eq.s32.totalorder %s26, 0
      %p173 = por %p171, %p172
      %p174 = scmp.ne.s32.totalorder %s162, %s163
      %p175 = scmp.eq.s32.totalorder %s27, 1
      %p176 = por %p174, %p175
      %p178 = scmp.ne.s32.totalorder %s163, %s177
      %p179 = scmp.eq.s32.totalorder %s27, 0
      %p180 = por %p178, %p179
      %s181 = ssub.s32 %s21, %s28
      %p182 = scmp.eq.s32.totalorder %s181, 0
      %s184 = sadd.s32 %s183, 1
      %s185 = scalar_select %p182, %s183, %s184
      %p188 = pneg %p182
      %p189 = scmp.eq.s32.totalorder %s21, 1
      %p190 = por %p188, %p189
      %p191 = scmp.ne.s32.totalorder %s183, %s186
      %p192 = scmp.eq.s32.totalorder %s21, 0
      %p193 = por %p191, %p192
      %p194 = scmp.ne.s32.totalorder %s183, %s186
      %p195 = scmp.eq.s32.totalorder %s26, 1
      %p196 = por %p194, %p195
      %p197 = scmp.ne.s32.totalorder %s186, %s187
      %p198 = scmp.eq.s32.totalorder %s26, 0
      %p199 = por %p197, %p198
      %p200 = scmp.ne.s32.totalorder %s186, %s187
      %p201 = scmp.eq.s32.totalorder %s27, 1
      %p202 = por %p200, %p201
      %p204 = scmp.ne.s32.totalorder %s187, %s203
      %p205 = scmp.eq.s32.totalorder %s27, 0
      %p206 = por %p204, %p205
      %p207 = scmp.le.s32.totalorder 1, %s21
      %p208 = scmp.lt.s32.totalorder %s21, 3
      %p209 = pnand %p207, %p208
      %p210 = pneg %p209
      // Predicated region
      $region9: #{tpu_custom_call.1} parent=5 // pred_check
        _
      $region10: #{tpu_custom_call.1} parent=5 // pred_check_branch
        %212 = sbr.rel (%p209) target = $region12
      $region11: #{tpu_custom_call.1} parent=5 // pred_region
        %s213 = ssub.s32 %s21, 1
        // Predicated region
        $region13: #{tpu_custom_call.1} parent=11 // pred_check
          %p214 = pneg %p68
        $region14: #{tpu_custom_call.1} parent=11 // pred_check_branch
          %216 = sbr.rel (%p214) target = $region16
        $region15: #{tpu_custom_call.1} parent=11 // pred_region
          %s218 = ssub.s32 1024, 1024
          %219 = vsyncadd [#allocation6], %s218
          %s220 = sshll.u32 [#allocation5], 4
          %s221 = int_to_ptr.vmem [resolvable:$true] %s220
          %226 = dma.hbm_to_vmem [thread:$0]  %s1, 1024, %s221, [#allocation6], 128, 128, 8
        $region16: #{tpu_custom_call.1} parent=11 // pred_fallthru
          _
        // Predicated region
        $region17: #{tpu_custom_call.1} parent=11 // pred_check
          %p227 = pneg %p89
        $region18: #{tpu_custom_call.1} parent=11 // pred_check_branch
          %229 = sbr.rel (%p227) target = $region20
        $region19: #{tpu_custom_call.1} parent=11 // pred_region
          _
        $region20: #{tpu_custom_call.1} parent=11 // pred_fallthru
          _
        // Predicated region
        $region21: #{tpu_custom_call.1} parent=11 // pred_check
          %p230 = pneg %p110
        $region22: #{tpu_custom_call.1} parent=11 // pred_check_branch
          %232 = sbr.rel (%p230) target = $region24
        $region23: #{tpu_custom_call.1} parent=11 // pred_region
          _
        $region24: #{tpu_custom_call.1} parent=11 // pred_fallthru
          _
        // Predicated region
        $region25: #{tpu_custom_call.1} parent=11 // pred_check
          %p233 = pneg %p131
        $region26: #{tpu_custom_call.1} parent=11 // pred_check_branch
          %235 = sbr.rel (%p233) target = $region28
        $region27: #{tpu_custom_call.1} parent=11 // pred_region
          %s237 = ssub.s32 128, 128
          %238 = vsyncadd [#allocation6], %s237
          %s240 = sshll.u32 [#allocation7], 4
          %s241 = int_to_ptr.vmem [resolvable:$true] %s240
          %243 = dma.hbm_to_vmem [thread:$0]  %s4, 128, %s241, [#allocation6]
        $region28: #{tpu_custom_call.1} parent=11 // pred_fallthru
          _
        // Predicated region
        $region29: #{tpu_custom_call.1} parent=11 // pred_check
          %p244 = pneg %p152
        $region30: #{tpu_custom_call.1} parent=11 // pred_check_branch
          %246 = sbr.rel (%p244) target = $region32
        $region31: #{tpu_custom_call.1} parent=11 // pred_region
          %s248 = ssub.s32 1024, 1024
          %249 = vsyncadd [#allocation9], %s248
          %s250 = sshll.u32 [#allocation8], 4
          %s251 = int_to_ptr.vmem [resolvable:$true] %s250
          %256 = dma.hbm_to_vmem [thread:$0]  %s5, 1024, %s251, [#allocation9], 128, 128, 8
        $region32: #{tpu_custom_call.1} parent=11 // pred_fallthru
          _
        // Predicated region
        $region33: #{tpu_custom_call.1} parent=11 // pred_check
          %p257 = pneg %p173
        $region34: #{tpu_custom_call.1} parent=11 // pred_check_branch
          %259 = sbr.rel (%p257) target = $region36
        $region35: #{tpu_custom_call.1} parent=11 // pred_region
          _
        $region36: #{tpu_custom_call.1} parent=11 // pred_fallthru
          _
      $region12: #{tpu_custom_call.1} parent=5 // pred_fallthru
        _
      %p260 = scmp.lt.s32.totalorder %s21, 2
      // Predicated region
      $region37: #{tpu_custom_call.1} parent=5 // pred_check
        %p261 = pneg %p260
      $region38: #{tpu_custom_call.1} parent=5 // pred_check_branch
        %263 = sbr.rel (%p261) target = $region40
      $region39: #{tpu_custom_call.1} parent=5 // pred_region
        // Predicated region
        $region41: #{tpu_custom_call.1} parent=39 // pred_check
          %p264 = pneg %p41
        $region42: #{tpu_custom_call.1} parent=39 // pred_check_branch
          %266 = sbr.rel (%p264) target = $region44
        $region43: #{tpu_custom_call.1} parent=39 // pred_region
          %s267 = sand.u32 %s31, 1
          %s268 = scalar_lea.sflag [#allocation3], %s267
          %s269 = sand.u32 %s31, 1
          %s270 = smul.addr %s269, 128
          %s271 = scalar_lea.vmem [#allocation2], %s270
          %s272 = smul.u32 8, %s21
          %s274 = ssub.s32 2048, 2048
          %275 = vsyncadd %s268, %s274
          %s276 = smul.addr %s272, 2
          %s277 = smul.addr %s276, 128
          %s278 = scalar_lea.hbm %s0, %s277
          %s279 = sshll.u32 %s271, 4
          %s280 = int_to_ptr.vmem [resolvable:$true] %s279
          %285 = dma.hbm_to_vmem [thread:$0]  %s278, 2048, %s280, %s268, 128, 128, 8
        $region44: #{tpu_custom_call.1} parent=39 // pred_fallthru
          _
      $region40: #{tpu_custom_call.1} parent=5 // pred_fallthru
        _
      %p286 = scmp.le.s32.totalorder 1, %s21
      %p287 = scmp.lt.s32.totalorder %s21, 3
      %p288 = pnand %p286, %p287
      %p289 = pneg %p288
      // Predicated region
      $region45: #{tpu_custom_call.1} parent=5 // pred_check
        _
      $region46: #{tpu_custom_call.1} parent=5 // pred_check_branch
        %291 = sbr.rel (%p288) target = $region48
      $region47: #{tpu_custom_call.1} parent=5 // pred_region
        %s292 = ssub.s32 %s21, 1
        %s293 = sand.u32 %s34, 1
        %s294 = scalar_lea.sflag [#allocation3], %s293
        %s295 = sand.u32 %s34, 1
        %s296 = smul.addr %s295, 128
        %s297 = scalar_lea.vmem [#allocation2], %s296
        // Predicated region
        $region49: #{tpu_custom_call.1} parent=47 // pred_check
          %p298 = pneg %p47
        $region50: #{tpu_custom_call.1} parent=47 // pred_check_branch
          %300 = sbr.rel (%p298) target = $region52
        $region51: #{tpu_custom_call.1} parent=47 // pred_region
          %301 = dma.done %s294, 2048
        $region52: #{tpu_custom_call.1} parent=47 // pred_fallthru
          _
        // Predicated region
        $region53: #{tpu_custom_call.1} parent=47 // pred_check
          %p302 = pneg %p68
        $region54: #{tpu_custom_call.1} parent=47 // pred_check_branch
          %304 = sbr.rel (%p302) target = $region56
        $region55: #{tpu_custom_call.1} parent=47 // pred_region
          %305 = dma.done [#allocation6], 1024
        $region56: #{tpu_custom_call.1} parent=47 // pred_fallthru
          _
        // Predicated region
        $region57: #{tpu_custom_call.1} parent=47 // pred_check
          %p306 = pneg %p131
        $region58: #{tpu_custom_call.1} parent=47 // pred_check_branch
          %308 = sbr.rel (%p306) target = $region60
        $region59: #{tpu_custom_call.1} parent=47 // pred_region
          %309 = dma.done [#allocation6], 128
        $region60: #{tpu_custom_call.1} parent=47 // pred_fallthru
          _
        // Predicated region
        $region61: #{tpu_custom_call.1} parent=47 // pred_check
          %p310 = pneg %p152
        $region62: #{tpu_custom_call.1} parent=47 // pred_check_branch
          %312 = sbr.rel (%p310) target = $region64
        $region63: #{tpu_custom_call.1} parent=47 // pred_region
          %313 = dma.done [#allocation9], 1024
        $region64: #{tpu_custom_call.1} parent=47 // pred_fallthru
          _
        %s314 = sand.u32 %s34, 1
        %s315 = scalar_lea.sflag [#allocation3], %s314
        %s316 = sand.u32 %s34, 1
        %s317 = smul.addr %s316, 128
        %s318 = scalar_lea.vmem [#allocation2], %s317
        %p319 = pneg %p47
        %p320 = pneg %p44
        %p321 = pneg %p68
        %p322 = pneg %p65
        %p323 = pneg %p89
        %p324 = pneg %p86
        %p325 = pneg %p110
        %p326 = pneg %p107
        %p327 = pneg %p131
        %p328 = pneg %p128
        %p329 = pneg %p152
        %p330 = pneg %p149
        %p331 = pneg %p173
        %p332 = pneg %p170
        %p333 = pneg %p199
        %p334 = pneg %p196
        %s335 = sand.u32 %s186, 1
        %s336 = scalar_lea.sflag [#allocation4], %s335
        %s337 = sand.u32 %s186, 1
        %s338 = smul.addr %s337, 8
        %s339 = scalar_lea.vmem [#allocation10], %s338
        %s340 = smul.u32 8, %s26
        %v341 = vld [vmem:[%s297] sm:$0xff]
        %v342 = vld [vmem:[%s297 + $0x8] sm:$0xff]
        %v343 = vld [vmem:[%s297 + $0x10] sm:$0xff]
        %v344 = vld [vmem:[%s297 + $0x18] sm:$0xff]
        %v345 = vld [vmem:[%s297 + $0x20] sm:$0xff]
        %v346 = vld [vmem:[%s297 + $0x28] sm:$0xff]
        %v347 = vld [vmem:[%s297 + $0x30] sm:$0xff]
        %v348 = vld [vmem:[%s297 + $0x38] sm:$0xff]
        %v349 = vld [vmem:[%s297 + $0x40] sm:$0xff]
        %v350 = vld [vmem:[%s297 + $0x48] sm:$0xff]
        %v351 = vld [vmem:[%s297 + $0x50] sm:$0xff]
        %v352 = vld [vmem:[%s297 + $0x58] sm:$0xff]
        %v353 = vld [vmem:[%s297 + $0x60] sm:$0xff]
        %v354 = vld [vmem:[%s297 + $0x68] sm:$0xff]
        %v355 = vld [vmem:[%s297 + $0x70] sm:$0xff]
        %v356 = vld [vmem:[%s297 + $0x78] sm:$0xff]
        %v357 = vld [vmem:[#allocation5] sm:$0xff]
        %v358 = vld [vmem:[#allocation5 + $0x8] sm:$0xff]
        %v359 = vld [vmem:[#allocation5 + $0x10] sm:$0xff]
        %v360 = vld [vmem:[#allocation5 + $0x18] sm:$0xff]
        %v361 = vld [vmem:[#allocation5 + $0x20] sm:$0xff]
        %v362 = vld [vmem:[#allocation5 + $0x28] sm:$0xff]
        %v363 = vld [vmem:[#allocation5 + $0x30] sm:$0xff]
        %v364 = vld [vmem:[#allocation5 + $0x38] sm:$0xff]
        %v365 = vld [vmem:[%s2] sm:$0x1]
        %v367 = vlaneseq
        %v368 = vshrl.u32 %v367, 7
        %v369 = vsub.s32 0, %v368
        %v370 = vrot.slane %v365, %v369
        %vm372 = vcmask 523264
        %v374 = vsel %vm372, %v341, 0
        %v377 = vsel %vm372, %v342, 0
        %v380 = vsel %vm372, %v343, 0
        %v383 = vsel %vm372, %v344, 0
        %v386 = vsel %vm372, %v345, 0
        %v389 = vsel %vm372, %v346, 0
        %v392 = vsel %vm372, %v347, 0
        %v395 = vsel %vm372, %v348, 0
        %v398 = vsel %vm372, %v349, 0
        %v401 = vsel %vm372, %v350, 0
        %v404 = vsel %vm372, %v351, 0
        %v407 = vsel %vm372, %v352, 0
        %v410 = vsel %vm372, %v353, 0
        %v413 = vsel %vm372, %v354, 0
        %v416 = vsel %vm372, %v355, 0
        %v419 = vsel %vm372, %v356, 0
        %421 = vmatprep.subr.mxu0 0.0
        %422 = vmatpush1.msra.mxu0 %v357
        %423 = vmatprep.subr.mxu0 0.0
        %424 = vmatpush1.msra.mxu0 %v358
        %425 = vmatprep.subr.mxu0 0.0
        %426 = vmatpush1.msra.mxu0 %v359
        %427 = vmatprep.subr.mxu0 0.0
        %428 = vmatpush1.msra.mxu0 %v360
        %429 = vmatprep.subr.mxu0 0.0
        %430 = vmatpush1.msra.mxu0 %v361
        %431 = vmatprep.subr.mxu0 0.0
        %432 = vmatpush1.msra.mxu0 %v362
        %433 = vmatprep.subr.mxu0 0.0
        %434 = vmatpush1.msra.mxu0 %v363
        %435 = vmatprep.subr.mxu0 0.0
        %436 = vmatpush1.msra.mxu0 %v364
        %437 = vmatprep.subr.mxu0 0.0
        %438 = vmatpush1.msra.mxu0 0.0
        %439 = vmatprep.subr.mxu0 0.0
        %440 = vmatpush1.msra.mxu0 0.0
        %441 = vmatprep.subr.mxu0 0.0
        %442 = vmatpush1.msra.mxu0 0.0
        %443 = vmatprep.subr.mxu0 0.0
        %444 = vmatpush1.msra.mxu0 0.0
        %445 = vmatprep.subr.mxu0 0.0
        %446 = vmatpush1.msra.mxu0 0.0
        %447 = vmatprep.subr.mxu0 0.0
        %448 = vmatpush1.msra.mxu0 0.0
        %449 = vmatprep.subr.mxu0 0.0
        %450 = vmatpush1.msra.mxu0 0.0
        %451 = vmatprep.subr.mxu0 0.0
        %452 = vmatpush1.msra.mxu0 0.0
        %453 = vmatprep.subr.mxu0 0.0
        %454 = vmatpush1.msra.mxu0 0.0
        %455 = vmatprep.subr.mxu0 0.0
        %456 = vmatpush1.msra.mxu0 0.0
        %457 = vmatprep.subr.mxu0 0.0
        %458 = vmatpush1.msra.mxu0 0.0
        %459 = vmatprep.subr.mxu0 0.0
        %460 = vmatpush1.msra.mxu0 0.0
        %461 = vmatprep.subr.mxu0 0.0
        %462 = vmatpush1.msra.mxu0 0.0
        %463 = vmatprep.subr.mxu0 0.0
        %464 = vmatpush1.msra.mxu0 0.0
        %465 = vmatprep.subr.mxu0 0.0
        %466 = vmatpush1.msra.mxu0 0.0
        %467 = vmatprep.subr.mxu0 0.0
        %468 = vmatpush1.msra.mxu0 0.0
        %469 = vmatprep.subr.mxu0 0.0
        %470 = vmatpush1.msra.mxu0 0.0
        %471 = vmatprep.subr.mxu0 0.0
        %472 = vmatpush1.msra.mxu0 0.0
        %473 = vmatprep.subr.mxu0 0.0
        %474 = vmatpush1.msra.mxu0 0.0
        %475 = vmatprep.subr.mxu0 0.0
        %476 = vmatpush1.msra.mxu0 0.0
        %477 = vmatprep.subr.mxu0 0.0
        %478 = vmatpush1.msra.mxu0 0.0
        %479 = vmatprep.subr.mxu0 0.0
        %480 = vmatpush1.msra.mxu0 0.0
        %481 = vmatprep.subr.mxu0 0.0
        %482 = vmatpush1.msra.mxu0 0.0
        %483 = vmatprep.subr.mxu0 0.0
        %484 = vmatpush1.msra.mxu0 0.0
        %485 = vmatprep.mubr.f32.mxu0 0.0
        %486 = vmatmul.mubr.f32.gmra.mrb[0].mxu0 %v374
        %v487 = vpop.f32.mrb[0].mxu0
        %v488 = vadd.f32 %v370, %v487
        %v489 = vpop.f32.mrb[0].mxu0
        %490 = vmatprep.mubr.f32.mxu0 0.0
        %491 = vmatmul.mubr.f32.gmra.mrb[0].mxu0 %v377
        %v492 = vpop.f32.mrb[0].mxu0
        %v493 = vadd.f32 %v370, %v492
        %v494 = vpop.f32.mrb[0].mxu0
        %495 = vmatprep.mubr.f32.mxu0 0.0
        %496 = vmatmul.mubr.f32.gmra.mrb[0].mxu0 %v380
        %v497 = vpop.f32.mrb[0].mxu0
        %v498 = vadd.f32 %v370, %v497
        %v499 = vpop.f32.mrb[0].mxu0
        %500 = vmatprep.mubr.f32.mxu0 0.0
        %501 = vmatmul.mubr.f32.gmra.mrb[0].mxu0 %v383
        %v502 = vpop.f32.mrb[0].mxu0
        %v503 = vadd.f32 %v370, %v502
        %v504 = vpop.f32.mrb[0].mxu0
        %505 = vmatprep.mubr.f32.mxu0 0.0
        %506 = vmatmul.mubr.f32.gmra.mrb[0].mxu0 %v386
        %v507 = vpop.f32.mrb[0].mxu0
        %v508 = vadd.f32 %v370, %v507
        %v509 = vpop.f32.mrb[0].mxu0
        %510 = vmatprep.mubr.f32.mxu0 0.0
        %511 = vmatmul.mubr.f32.gmra.mrb[0].mxu0 %v389
        %v512 = vpop.f32.mrb[0].mxu0
        %v513 = vadd.f32 %v370, %v512
        %v514 = vpop.f32.mrb[0].mxu0
        %515 = vmatprep.mubr.f32.mxu0 0.0
        %516 = vmatmul.mubr.f32.gmra.mrb[0].mxu0 %v392
        %v517 = vpop.f32.mrb[0].mxu0
        %v518 = vadd.f32 %v370, %v517
        %v519 = vpop.f32.mrb[0].mxu0
        %520 = vmatprep.mubr.f32.mxu0 0.0
        %521 = vmatmul.mubr.f32.gmra.mrb[0].mxu0 %v395
        %v522 = vpop.f32.mrb[0].mxu0
        %v523 = vadd.f32 %v370, %v522
        %v524 = vpop.f32.mrb[0].mxu0
        %525 = vmatprep.mubr.f32.mxu0 0.0
        %526 = vmatmul.mubr.f32.gmra.mrb[0].mxu0 %v398
        %v527 = vpop.f32.mrb[0].mxu0
        %v528 = vadd.f32 %v370, %v527
        %v529 = vpop.f32.mrb[0].mxu0
        %530 = vmatprep.mubr.f32.mxu0 0.0
        %531 = vmatmul.mubr.f32.gmra.mrb[0].mxu0 %v401
        %v532 = vpop.f32.mrb[0].mxu0
        %v533 = vadd.f32 %v370, %v532
        %v534 = vpop.f32.mrb[0].mxu0
        %535 = vmatprep.mubr.f32.mxu0 0.0
        %536 = vmatmul.mubr.f32.gmra.mrb[0].mxu0 %v404
        %v537 = vpop.f32.mrb[0].mxu0
        %v538 = vadd.f32 %v370, %v537
        %v539 = vpop.f32.mrb[0].mxu0
        %540 = vmatprep.mubr.f32.mxu0 0.0
        %541 = vmatmul.mubr.f32.gmra.mrb[0].mxu0 %v407
        %v542 = vpop.f32.mrb[0].mxu0
        %v543 = vadd.f32 %v370, %v542
        %v544 = vpop.f32.mrb[0].mxu0
        %545 = vmatprep.mubr.f32.mxu0 0.0
        %546 = vmatmul.mubr.f32.gmra.mrb[0].mxu0 %v410
        %v547 = vpop.f32.mrb[0].mxu0
        %v548 = vadd.f32 %v370, %v547
        %v549 = vpop.f32.mrb[0].mxu0
        %550 = vmatprep.mubr.f32.mxu0 0.0
        %551 = vmatmul.mubr.f32.gmra.mrb[0].mxu0 %v413
        %v552 = vpop.f32.mrb[0].mxu0
        %v553 = vadd.f32 %v370, %v552
        %v554 = vpop.f32.mrb[0].mxu0
        %555 = vmatprep.mubr.f32.mxu0 0.0
        %556 = vmatmul.mubr.f32.gmra.mrb[0].mxu0 %v416
        %v557 = vpop.f32.mrb[0].mxu0
        %v558 = vadd.f32 %v370, %v557
        %v559 = vpop.f32.mrb[0].mxu0
        %560 = vmatprep.mubr.f32.mxu0 0.0
        %561 = vmatmul.mubr.f32.gmra.mrb[0].mxu0 %v419
        %v562 = vpop.f32.mrb[0].mxu0
        %v563 = vadd.f32 %v370, %v562
        %v564 = vpop.f32.mrb[0].mxu0
        %565 = vdwg.mxu0
        %v566 = vld [vmem:[%s3] sm:$0xff]
        %v568 = vsel %vm372, %v566, 0
        %v571 = vsel %vm372, %v488, 0
        %v574 = vsel %vm372, %v493, 0
        %576 = vmatprep.subr.mxu0 0.0
        %577 = vmatpush1.xpose.msra.mxu0 %v571
        %578 = vmatprep.subr.mxu0 0.0
        %579 = vmatpush1.xpose.msra.mxu0 %v574
        %580 = vmatprep.subr.mxu0 0.0
        %581 = vmatpush1.xpose.msra.mxu0 0.0
        %582 = vmatprep.subr.mxu0 0.0
        %583 = vmatpush1.xpose.msra.mxu0 0.0
        %584 = vmatprep.subr.mxu0 0.0
        %585 = vmatpush1.xpose.msra.mxu0 0.0
        %586 = vmatprep.subr.mxu0 0.0
        %587 = vmatpush1.xpose.msra.mxu0 0.0
        %588 = vmatprep.subr.mxu0 0.0
        %589 = vmatpush1.xpose.msra.mxu0 0.0
        %590 = vmatprep.subr.mxu0 0.0
        %591 = vmatpush1.xpose.msra.mxu0 0.0
        %592 = vmatprep.subr.mxu0 0.0
        %593 = vmatpush1.xpose.msra.mxu0 0.0
        %594 = vmatprep.subr.mxu0 0.0
        %595 = vmatpush1.xpose.msra.mxu0 0.0
        %596 = vmatprep.subr.mxu0 0.0
        %597 = vmatpush1.xpose.msra.mxu0 0.0
        %598 = vmatprep.subr.mxu0 0.0
        %599 = vmatpush1.xpose.msra.mxu0 0.0
        %600 = vmatprep.subr.mxu0 0.0
        %601 = vmatpush1.xpose.msra.mxu0 0.0
        %602 = vmatprep.subr.mxu0 0.0
        %603 = vmatpush1.xpose.msra.mxu0 0.0
        %604 = vmatprep.subr.mxu0 0.0
        %605 = vmatpush1.xpose.msra.mxu0 0.0
        %606 = vmatprep.subr.mxu0 0.0
        %607 = vmatpush1.xpose.msra.mxu0 0.0
        %608 = vmatprep.subr.mxu0 0.0
        %609 = vmatpush1.xpose.msra.mxu0 0.0
        %610 = vmatprep.subr.mxu0 0.0
        %611 = vmatpush1.xpose.msra.mxu0 0.0
        %612 = vmatprep.subr.mxu0 0.0
        %613 = vmatpush1.xpose.msra.mxu0 0.0
        %614 = vmatprep.subr.mxu0 0.0
        %615 = vmatpush1.xpose.msra.mxu0 0.0
        %616 = vmatprep.subr.mxu0 0.0
        %617 = vmatpush1.xpose.msra.mxu0 0.0
        %618 = vmatprep.subr.mxu0 0.0
        %619 = vmatpush1.xpose.msra.mxu0 0.0
        %620 = vmatprep.subr.mxu0 0.0
        %621 = vmatpush1.xpose.msra.mxu0 0.0
        %622 = vmatprep.subr.mxu0 0.0
        %623 = vmatpush1.xpose.msra.mxu0 0.0
        %624 = vmatprep.subr.mxu0 0.0
        %625 = vmatpush1.xpose.msra.mxu0 0.0
        %626 = vmatprep.subr.mxu0 0.0
        %627 = vmatpush1.xpose.msra.mxu0 0.0
        %628 = vmatprep.subr.mxu0 0.0
        %629 = vmatpush1.xpose.msra.mxu0 0.0
        %630 = vmatprep.subr.mxu0 0.0
        %631 = vmatpush1.xpose.msra.mxu0 0.0
        %632 = vmatprep.subr.mxu0 0.0
        %633 = vmatpush1.xpose.msra.mxu0 0.0
        %634 = vmatprep.subr.mxu0 0.0
        %635 = vmatpush1.xpose.msra.mxu0 0.0
        %636 = vmatprep.subr.mxu0 0.0
        %637 = vmatpush1.xpose.msra.mxu0 0.0
        %638 = vmatprep.subr.mxu0 0.0
        %639 = vmatpush1.xpose.msra.mxu0 0.0
        %640 = vmatprep.mubr.f32.mxu0 0.0
        %641 = vmatmul.mubr.f32.gmra.mrb[0].mxu0 %v568
        %v642 = vpop.f32.mrb[0].mxu0
        %v643 = vadd.f32 0.0, %v642
        %v644 = vpop.f32.mrb[0].mxu0
        %645 = vdwg.mxu0
        %v647 = vsel %vm372, %v498, 0
        %v650 = vsel %vm372, %v503, 0
        %652 = vmatprep.subr.mxu0 0.0
        %653 = vmatpush1.xpose.msra.mxu0 %v647
        %654 = vmatprep.subr.mxu0 0.0
        %655 = vmatpush1.xpose.msra.mxu0 %v650
        %656 = vmatprep.subr.mxu0 0.0
        %657 = vmatpush1.xpose.msra.mxu0 0.0
        %658 = vmatprep.subr.mxu0 0.0
        %659 = vmatpush1.xpose.msra.mxu0 0.0
        %660 = vmatprep.subr.mxu0 0.0
        %661 = vmatpush1.xpose.msra.mxu0 0.0
        %662 = vmatprep.subr.mxu0 0.0
        %663 = vmatpush1.xpose.msra.mxu0 0.0
        %664 = vmatprep.subr.mxu0 0.0
        %665 = vmatpush1.xpose.msra.mxu0 0.0
        %666 = vmatprep.subr.mxu0 0.0
        %667 = vmatpush1.xpose.msra.mxu0 0.0
        %668 = vmatprep.subr.mxu0 0.0
        %669 = vmatpush1.xpose.msra.mxu0 0.0
        %670 = vmatprep.subr.mxu0 0.0
        %671 = vmatpush1.xpose.msra.mxu0 0.0
        %672 = vmatprep.subr.mxu0 0.0
        %673 = vmatpush1.xpose.msra.mxu0 0.0
        %674 = vmatprep.subr.mxu0 0.0
        %675 = vmatpush1.xpose.msra.mxu0 0.0
        %676 = vmatprep.subr.mxu0 0.0
        %677 = vmatpush1.xpose.msra.mxu0 0.0
        %678 = vmatprep.subr.mxu0 0.0
        %679 = vmatpush1.xpose.msra.mxu0 0.0
        %680 = vmatprep.subr.mxu0 0.0
        %681 = vmatpush1.xpose.msra.mxu0 0.0
        %682 = vmatprep.subr.mxu0 0.0
        %683 = vmatpush1.xpose.msra.mxu0 0.0
        %684 = vmatprep.subr.mxu0 0.0
        %685 = vmatpush1.xpose.msra.mxu0 0.0
        %686 = vmatprep.subr.mxu0 0.0
        %687 = vmatpush1.xpose.msra.mxu0 0.0
        %688 = vmatprep.subr.mxu0 0.0
        %689 = vmatpush1.xpose.msra.mxu0 0.0
        %690 = vmatprep.subr.mxu0 0.0
        %691 = vmatpush1.xpose.msra.mxu0 0.0
        %692 = vmatprep.subr.mxu0 0.0
        %693 = vmatpush1.xpose.msra.mxu0 0.0
        %694 = vmatprep.subr.mxu0 0.0
        %695 = vmatpush1.xpose.msra.mxu0 0.0
        %696 = vmatprep.subr.mxu0 0.0
        %697 = vmatpush1.xpose.msra.mxu0 0.0
        %698 = vmatprep.subr.mxu0 0.0
        %699 = vmatpush1.xpose.msra.mxu0 0.0
        %700 = vmatprep.subr.mxu0 0.0
        %701 = vmatpush1.xpose.msra.mxu0 0.0
        %702 = vmatprep.subr.mxu0 0.0
        %703 = vmatpush1.xpose.msra.mxu0 0.0
        %704 = vmatprep.subr.mxu0 0.0
        %705 = vmatpush1.xpose.msra.mxu0 0.0
        %706 = vmatprep.subr.mxu0 0.0
        %707 = vmatpush1.xpose.msra.mxu0 0.0
        %708 = vmatprep.subr.mxu0 0.0
        %709 = vmatpush1.xpose.msra.mxu0 0.0
        %710 = vmatprep.subr.mxu0 0.0
        %711 = vmatpush1.xpose.msra.mxu0 0.0
        %712 = vmatprep.subr.mxu0 0.0
        %713 = vmatpush1.xpose.msra.mxu0 0.0
        %714 = vmatprep.subr.mxu0 0.0
        %715 = vmatpush1.xpose.msra.mxu0 0.0
        %716 = vmatprep.mubr.f32.mxu0 0.0
        %717 = vmatmul.mubr.f32.gmra.mrb[0].mxu0 %v568
        %v718 = vpop.f32.mrb[0].mxu0
        %v719 = vadd.f32 0.0, %v718
        %v720 = vpop.f32.mrb[0].mxu0
        %721 = vdwg.mxu0
        %v723 = vsel %vm372, %v508, 0
        %v726 = vsel %vm372, %v513, 0
        %728 = vmatprep.subr.mxu0 0.0
        %729 = vmatpush1.xpose.msra.mxu0 %v723
        %730 = vmatprep.subr.mxu0 0.0
        %731 = vmatpush1.xpose.msra.mxu0 %v726
        %732 = vmatprep.subr.mxu0 0.0
        %733 = vmatpush1.xpose.msra.mxu0 0.0
        %734 = vmatprep.subr.mxu0 0.0
        %735 = vmatpush1.xpose.msra.mxu0 0.0
        %736 = vmatprep.subr.mxu0 0.0
        %737 = vmatpush1.xpose.msra.mxu0 0.0
        %738 = vmatprep.subr.mxu0 0.0
        %739 = vmatpush1.xpose.msra.mxu0 0.0
        %740 = vmatprep.subr.mxu0 0.0
        %741 = vmatpush1.xpose.msra.mxu0 0.0
        %742 = vmatprep.subr.mxu0 0.0
        %743 = vmatpush1.xpose.msra.mxu0 0.0
        %744 = vmatprep.subr.mxu0 0.0
        %745 = vmatpush1.xpose.msra.mxu0 0.0
        %746 = vmatprep.subr.mxu0 0.0
        %747 = vmatpush1.xpose.msra.mxu0 0.0
        %748 = vmatprep.subr.mxu0 0.0
        %749 = vmatpush1.xpose.msra.mxu0 0.0
        %750 = vmatprep.subr.mxu0 0.0
        %751 = vmatpush1.xpose.msra.mxu0 0.0
        %752 = vmatprep.subr.mxu0 0.0
        %753 = vmatpush1.xpose.msra.mxu0 0.0
        %754 = vmatprep.subr.mxu0 0.0
        %755 = vmatpush1.xpose.msra.mxu0 0.0
        %756 = vmatprep.subr.mxu0 0.0
        %757 = vmatpush1.xpose.msra.mxu0 0.0
        %758 = vmatprep.subr.mxu0 0.0
        %759 = vmatpush1.xpose.msra.mxu0 0.0
        %760 = vmatprep.subr.mxu0 0.0
        %761 = vmatpush1.xpose.msra.mxu0 0.0
        %762 = vmatprep.subr.mxu0 0.0
        %763 = vmatpush1.xpose.msra.mxu0 0.0
        %764 = vmatprep.subr.mxu0 0.0
        %765 = vmatpush1.xpose.msra.mxu0 0.0
        %766 = vmatprep.subr.mxu0 0.0
        %767 = vmatpush1.xpose.msra.mxu0 0.0
        %768 = vmatprep.subr.mxu0 0.0
        %769 = vmatpush1.xpose.msra.mxu0 0.0
        %770 = vmatprep.subr.mxu0 0.0
        %771 = vmatpush1.xpose.msra.mxu0 0.0
        %772 = vmatprep.subr.mxu0 0.0
        %773 = vmatpush1.xpose.msra.mxu0 0.0
        %774 = vmatprep.subr.mxu0 0.0
        %775 = vmatpush1.xpose.msra.mxu0 0.0
        %776 = vmatprep.subr.mxu0 0.0
        %777 = vmatpush1.xpose.msra.mxu0 0.0
        %778 = vmatprep.subr.mxu0 0.0
        %779 = vmatpush1.xpose.msra.mxu0 0.0
        %780 = vmatprep.subr.mxu0 0.0
        %781 = vmatpush1.xpose.msra.mxu0 0.0
        %782 = vmatprep.subr.mxu0 0.0
        %783 = vmatpush1.xpose.msra.mxu0 0.0
        %784 = vmatprep.subr.mxu0 0.0
        %785 = vmatpush1.xpose.msra.mxu0 0.0
        %786 = vmatprep.subr.mxu0 0.0
        %787 = vmatpush1.xpose.msra.mxu0 0.0
        %788 = vmatprep.subr.mxu0 0.0
        %789 = vmatpush1.xpose.msra.mxu0 0.0
        %790 = vmatprep.subr.mxu0 0.0
        %791 = vmatpush1.xpose.msra.mxu0 0.0
        %792 = vmatprep.mubr.f32.mxu0 0.0
        %793 = vmatmul.mubr.f32.gmra.mrb[0].mxu0 %v568
        %v794 = vpop.f32.mrb[0].mxu0
        %v795 = vadd.f32 0.0, %v794
        %v796 = vpop.f32.mrb[0].mxu0
        %797 = vdwg.mxu0
        %v799 = vsel %vm372, %v518, 0
        %v802 = vsel %vm372, %v523, 0
        %804 = vmatprep.subr.mxu0 0.0
        %805 = vmatpush1.xpose.msra.mxu0 %v799
        %806 = vmatprep.subr.mxu0 0.0
        %807 = vmatpush1.xpose.msra.mxu0 %v802
        %808 = vmatprep.subr.mxu0 0.0
        %809 = vmatpush1.xpose.msra.mxu0 0.0
        %810 = vmatprep.subr.mxu0 0.0
        %811 = vmatpush1.xpose.msra.mxu0 0.0
        %812 = vmatprep.subr.mxu0 0.0
        %813 = vmatpush1.xpose.msra.mxu0 0.0
        %814 = vmatprep.subr.mxu0 0.0
        %815 = vmatpush1.xpose.msra.mxu0 0.0
        %816 = vmatprep.subr.mxu0 0.0
        %817 = vmatpush1.xpose.msra.mxu0 0.0
        %818 = vmatprep.subr.mxu0 0.0
        %819 = vmatpush1.xpose.msra.mxu0 0.0
        %820 = vmatprep.subr.mxu0 0.0
        %821 = vmatpush1.xpose.msra.mxu0 0.0
        %822 = vmatprep.subr.mxu0 0.0
        %823 = vmatpush1.xpose.msra.mxu0 0.0
        %824 = vmatprep.subr.mxu0 0.0
        %825 = vmatpush1.xpose.msra.mxu0 0.0
        %826 = vmatprep.subr.mxu0 0.0
        %827 = vmatpush1.xpose.msra.mxu0 0.0
        %828 = vmatprep.subr.mxu0 0.0
        %829 = vmatpush1.xpose.msra.mxu0 0.0
        %830 = vmatprep.subr.mxu0 0.0
        %831 = vmatpush1.xpose.msra.mxu0 0.0
        %832 = vmatprep.subr.mxu0 0.0
        %833 = vmatpush1.xpose.msra.mxu0 0.0
        %834 = vmatprep.subr.mxu0 0.0
        %835 = vmatpush1.xpose.msra.mxu0 0.0
        %836 = vmatprep.subr.mxu0 0.0
        %837 = vmatpush1.xpose.msra.mxu0 0.0
        %838 = vmatprep.subr.mxu0 0.0
        %839 = vmatpush1.xpose.msra.mxu0 0.0
        %840 = vmatprep.subr.mxu0 0.0
        %841 = vmatpush1.xpose.msra.mxu0 0.0
        %842 = vmatprep.subr.mxu0 0.0
        %843 = vmatpush1.xpose.msra.mxu0 0.0
        %844 = vmatprep.subr.mxu0 0.0
        %845 = vmatpush1.xpose.msra.mxu0 0.0
        %846 = vmatprep.subr.mxu0 0.0
        %847 = vmatpush1.xpose.msra.mxu0 0.0
        %848 = vmatprep.subr.mxu0 0.0
        %849 = vmatpush1.xpose.msra.mxu0 0.0
        %850 = vmatprep.subr.mxu0 0.0
        %851 = vmatpush1.xpose.msra.mxu0 0.0
        %852 = vmatprep.subr.mxu0 0.0
        %853 = vmatpush1.xpose.msra.mxu0 0.0
        %854 = vmatprep.subr.mxu0 0.0
        %855 = vmatpush1.xpose.msra.mxu0 0.0
        %856 = vmatprep.subr.mxu0 0.0
        %857 = vmatpush1.xpose.msra.mxu0 0.0
        %858 = vmatprep.subr.mxu0 0.0
        %859 = vmatpush1.xpose.msra.mxu0 0.0
        %860 = vmatprep.subr.mxu0 0.0
        %861 = vmatpush1.xpose.msra.mxu0 0.0
        %862 = vmatprep.subr.mxu0 0.0
        %863 = vmatpush1.xpose.msra.mxu0 0.0
        %864 = vmatprep.subr.mxu0 0.0
        %865 = vmatpush1.xpose.msra.mxu0 0.0
        %866 = vmatprep.subr.mxu0 0.0
        %867 = vmatpush1.xpose.msra.mxu0 0.0
        %868 = vmatprep.mubr.f32.mxu0 0.0
        %869 = vmatmul.mubr.f32.gmra.mrb[0].mxu0 %v568
        %v870 = vpop.f32.mrb[0].mxu0
        %v871 = vadd.f32 0.0, %v870
        %v872 = vpop.f32.mrb[0].mxu0
        %873 = vdwg.mxu0
        %v875 = vsel %vm372, %v528, 0
        %v878 = vsel %vm372, %v533, 0
        %880 = vmatprep.subr.mxu0 0.0
        %881 = vmatpush1.xpose.msra.mxu0 %v875
        %882 = vmatprep.subr.mxu0 0.0
        %883 = vmatpush1.xpose.msra.mxu0 %v878
        %884 = vmatprep.subr.mxu0 0.0
        %885 = vmatpush1.xpose.msra.mxu0 0.0
        %886 = vmatprep.subr.mxu0 0.0
        %887 = vmatpush1.xpose.msra.mxu0 0.0
        %888 = vmatprep.subr.mxu0 0.0
        %889 = vmatpush1.xpose.msra.mxu0 0.0
        %890 = vmatprep.subr.mxu0 0.0
        %891 = vmatpush1.xpose.msra.mxu0 0.0
        %892 = vmatprep.subr.mxu0 0.0
        %893 = vmatpush1.xpose.msra.mxu0 0.0
        %894 = vmatprep.subr.mxu0 0.0
        %895 = vmatpush1.xpose.msra.mxu0 0.0
        %896 = vmatprep.subr.mxu0 0.0
        %897 = vmatpush1.xpose.msra.mxu0 0.0
        %898 = vmatprep.subr.mxu0 0.0
        %899 = vmatpush1.xpose.msra.mxu0 0.0
        %900 = vmatprep.subr.mxu0 0.0
        %901 = vmatpush1.xpose.msra.mxu0 0.0
        %902 = vmatprep.subr.mxu0 0.0
        %903 = vmatpush1.xpose.msra.mxu0 0.0
        %904 = vmatprep.subr.mxu0 0.0
        %905 = vmatpush1.xpose.msra.mxu0 0.0
        %906 = vmatprep.subr.mxu0 0.0
        %907 = vmatpush1.xpose.msra.mxu0 0.0
        %908 = vmatprep.subr.mxu0 0.0
        %909 = vmatpush1.xpose.msra.mxu0 0.0
        %910 = vmatprep.subr.mxu0 0.0
        %911 = vmatpush1.xpose.msra.mxu0 0.0
        %912 = vmatprep.subr.mxu0 0.0
        %913 = vmatpush1.xpose.msra.mxu0 0.0
        %914 = vmatprep.subr.mxu0 0.0
        %915 = vmatpush1.xpose.msra.mxu0 0.0
        %916 = vmatprep.subr.mxu0 0.0
        %917 = vmatpush1.xpose.msra.mxu0 0.0
        %918 = vmatprep.subr.mxu0 0.0
        %919 = vmatpush1.xpose.msra.mxu0 0.0
        %920 = vmatprep.subr.mxu0 0.0
        %921 = vmatpush1.xpose.msra.mxu0 0.0
        %922 = vmatprep.subr.mxu0 0.0
        %923 = vmatpush1.xpose.msra.mxu0 0.0
        %924 = vmatprep.subr.mxu0 0.0
        %925 = vmatpush1.xpose.msra.mxu0 0.0
        %926 = vmatprep.subr.mxu0 0.0
        %927 = vmatpush1.xpose.msra.mxu0 0.0
        %928 = vmatprep.subr.mxu0 0.0
        %929 = vmatpush1.xpose.msra.mxu0 0.0
        %930 = vmatprep.subr.mxu0 0.0
        %931 = vmatpush1.xpose.msra.mxu0 0.0
        %932 = vmatprep.subr.mxu0 0.0
        %933 = vmatpush1.xpose.msra.mxu0 0.0
        %934 = vmatprep.subr.mxu0 0.0
        %935 = vmatpush1.xpose.msra.mxu0 0.0
        %936 = vmatprep.subr.mxu0 0.0
        %937 = vmatpush1.xpose.msra.mxu0 0.0
        %938 = vmatprep.subr.mxu0 0.0
        %939 = vmatpush1.xpose.msra.mxu0 0.0
        %940 = vmatprep.subr.mxu0 0.0
        %941 = vmatpush1.xpose.msra.mxu0 0.0
        %942 = vmatprep.subr.mxu0 0.0
        %943 = vmatpush1.xpose.msra.mxu0 0.0
        %944 = vmatprep.mubr.f32.mxu0 0.0
        %945 = vmatmul.mubr.f32.gmra.mrb[0].mxu0 %v568
        %v946 = vpop.f32.mrb[0].mxu0
        %v947 = vadd.f32 0.0, %v946
        %v948 = vpop.f32.mrb[0].mxu0
        %949 = vdwg.mxu0
        %v951 = vsel %vm372, %v538, 0
        %v954 = vsel %vm372, %v543, 0
        %956 = vmatprep.subr.mxu0 0.0
        %957 = vmatpush1.xpose.msra.mxu0 %v951
        %958 = vmatprep.subr.mxu0 0.0
        %959 = vmatpush1.xpose.msra.mxu0 %v954
        %960 = vmatprep.subr.mxu0 0.0
        %961 = vmatpush1.xpose.msra.mxu0 0.0
        %962 = vmatprep.subr.mxu0 0.0
        %963 = vmatpush1.xpose.msra.mxu0 0.0
        %964 = vmatprep.subr.mxu0 0.0
        %965 = vmatpush1.xpose.msra.mxu0 0.0
        %966 = vmatprep.subr.mxu0 0.0
        %967 = vmatpush1.xpose.msra.mxu0 0.0
        %968 = vmatprep.subr.mxu0 0.0
        %969 = vmatpush1.xpose.msra.mxu0 0.0
        %970 = vmatprep.subr.mxu0 0.0
        %971 = vmatpush1.xpose.msra.mxu0 0.0
        %972 = vmatprep.subr.mxu0 0.0
        %973 = vmatpush1.xpose.msra.mxu0 0.0
        %974 = vmatprep.subr.mxu0 0.0
        %975 = vmatpush1.xpose.msra.mxu0 0.0
        %976 = vmatprep.subr.mxu0 0.0
        %977 = vmatpush1.xpose.msra.mxu0 0.0
        %978 = vmatprep.subr.mxu0 0.0
        %979 = vmatpush1.xpose.msra.mxu0 0.0
        %980 = vmatprep.subr.mxu0 0.0
        %981 = vmatpush1.xpose.msra.mxu0 0.0
        %982 = vmatprep.subr.mxu0 0.0
        %983 = vmatpush1.xpose.msra.mxu0 0.0
        %984 = vmatprep.subr.mxu0 0.0
        %985 = vmatpush1.xpose.msra.mxu0 0.0
        %986 = vmatprep.subr.mxu0 0.0
        %987 = vmatpush1.xpose.msra.mxu0 0.0
        %988 = vmatprep.subr.mxu0 0.0
        %989 = vmatpush1.xpose.msra.mxu0 0.0
        %990 = vmatprep.subr.mxu0 0.0
        %991 = vmatpush1.xpose.msra.mxu0 0.0
        %992 = vmatprep.subr.mxu0 0.0
        %993 = vmatpush1.xpose.msra.mxu0 0.0
        %994 = vmatprep.subr.mxu0 0.0
        %995 = vmatpush1.xpose.msra.mxu0 0.0
        %996 = vmatprep.subr.mxu0 0.0
        %997 = vmatpush1.xpose.msra.mxu0 0.0
        %998 = vmatprep.subr.mxu0 0.0
        %999 = vmatpush1.xpose.msra.mxu0 0.0
        %1000 = vmatprep.subr.mxu0 0.0
        %1001 = vmatpush1.xpose.msra.mxu0 0.0
        %1002 = vmatprep.subr.mxu0 0.0
        %1003 = vmatpush1.xpose.msra.mxu0 0.0
        %1004 = vmatprep.subr.mxu0 0.0
        %1005 = vmatpush1.xpose.msra.mxu0 0.0
        %1006 = vmatprep.subr.mxu0 0.0
        %1007 = vmatpush1.xpose.msra.mxu0 0.0
        %1008 = vmatprep.subr.mxu0 0.0
        %1009 = vmatpush1.xpose.msra.mxu0 0.0
        %1010 = vmatprep.subr.mxu0 0.0
        %1011 = vmatpush1.xpose.msra.mxu0 0.0
        %1012 = vmatprep.subr.mxu0 0.0
        %1013 = vmatpush1.xpose.msra.mxu0 0.0
        %1014 = vmatprep.subr.mxu0 0.0
        %1015 = vmatpush1.xpose.msra.mxu0 0.0
        %1016 = vmatprep.subr.mxu0 0.0
        %1017 = vmatpush1.xpose.msra.mxu0 0.0
        %1018 = vmatprep.subr.mxu0 0.0
        %1019 = vmatpush1.xpose.msra.mxu0 0.0
        %1020 = vmatprep.mubr.f32.mxu0 0.0
        %1021 = vmatmul.mubr.f32.gmra.mrb[0].mxu0 %v568
        %v1022 = vpop.f32.mrb[0].mxu0
        %v1023 = vadd.f32 0.0, %v1022
        %v1024 = vpop.f32.mrb[0].mxu0
        %1025 = vdwg.mxu0
        %v1027 = vsel %vm372, %v548, 0
        %v1030 = vsel %vm372, %v553, 0
        %1032 = vmatprep.subr.mxu0 0.0
        %1033 = vmatpush1.xpose.msra.mxu0 %v1027
        %1034 = vmatprep.subr.mxu0 0.0
        %1035 = vmatpush1.xpose.msra.mxu0 %v1030
        %1036 = vmatprep.subr.mxu0 0.0
        %1037 = vmatpush1.xpose.msra.mxu0 0.0
        %1038 = vmatprep.subr.mxu0 0.0
        %1039 = vmatpush1.xpose.msra.mxu0 0.0
        %1040 = vmatprep.subr.mxu0 0.0
        %1041 = vmatpush1.xpose.msra.mxu0 0.0
        %1042 = vmatprep.subr.mxu0 0.0
        %1043 = vmatpush1.xpose.msra.mxu0 0.0
        %1044 = vmatprep.subr.mxu0 0.0
        %1045 = vmatpush1.xpose.msra.mxu0 0.0
        %1046 = vmatprep.subr.mxu0 0.0
        %1047 = vmatpush1.xpose.msra.mxu0 0.0
        %1048 = vmatprep.subr.mxu0 0.0
        %1049 = vmatpush1.xpose.msra.mxu0 0.0
        %1050 = vmatprep.subr.mxu0 0.0
        %1051 = vmatpush1.xpose.msra.mxu0 0.0
        %1052 = vmatprep.subr.mxu0 0.0
        %1053 = vmatpush1.xpose.msra.mxu0 0.0
        %1054 = vmatprep.subr.mxu0 0.0
        %1055 = vmatpush1.xpose.msra.mxu0 0.0
        %1056 = vmatprep.subr.mxu0 0.0
        %1057 = vmatpush1.xpose.msra.mxu0 0.0
        %1058 = vmatprep.subr.mxu0 0.0
        %1059 = vmatpush1.xpose.msra.mxu0 0.0
        %1060 = vmatprep.subr.mxu0 0.0
        %1061 = vmatpush1.xpose.msra.mxu0 0.0
        %1062 = vmatprep.subr.mxu0 0.0
        %1063 = vmatpush1.xpose.msra.mxu0 0.0
        %1064 = vmatprep.subr.mxu0 0.0
        %1065 = vmatpush1.xpose.msra.mxu0 0.0
        %1066 = vmatprep.subr.mxu0 0.0
        %1067 = vmatpush1.xpose.msra.mxu0 0.0
        %1068 = vmatprep.subr.mxu0 0.0
        %1069 = vmatpush1.xpose.msra.mxu0 0.0
        %1070 = vmatprep.subr.mxu0 0.0
        %1071 = vmatpush1.xpose.msra.mxu0 0.0
        %1072 = vmatprep.subr.mxu0 0.0
        %1073 = vmatpush1.xpose.msra.mxu0 0.0
        %1074 = vmatprep.subr.mxu0 0.0
        %1075 = vmatpush1.xpose.msra.mxu0 0.0
        %1076 = vmatprep.subr.mxu0 0.0
        %1077 = vmatpush1.xpose.msra.mxu0 0.0
        %1078 = vmatprep.subr.mxu0 0.0
        %1079 = vmatpush1.xpose.msra.mxu0 0.0
        %1080 = vmatprep.subr.mxu0 0.0
        %1081 = vmatpush1.xpose.msra.mxu0 0.0
        %1082 = vmatprep.subr.mxu0 0.0
        %1083 = vmatpush1.xpose.msra.mxu0 0.0
        %1084 = vmatprep.subr.mxu0 0.0
        %1085 = vmatpush1.xpose.msra.mxu0 0.0
        %1086 = vmatprep.subr.mxu0 0.0
        %1087 = vmatpush1.xpose.msra.mxu0 0.0
        %1088 = vmatprep.subr.mxu0 0.0
        %1089 = vmatpush1.xpose.msra.mxu0 0.0
        %1090 = vmatprep.subr.mxu0 0.0
        %1091 = vmatpush1.xpose.msra.mxu0 0.0
        %1092 = vmatprep.subr.mxu0 0.0
        %1093 = vmatpush1.xpose.msra.mxu0 0.0
        %1094 = vmatprep.subr.mxu0 0.0
        %1095 = vmatpush1.xpose.msra.mxu0 0.0
        %1096 = vmatprep.mubr.f32.mxu0 0.0
        %1097 = vmatmul.mubr.f32.gmra.mrb[0].mxu0 %v568
        %v1098 = vpop.f32.mrb[0].mxu0
        %v1099 = vadd.f32 0.0, %v1098
        %v1100 = vpop.f32.mrb[0].mxu0
        %1101 = vdwg.mxu0
        %v1103 = vsel %vm372, %v558, 0
        %v1106 = vsel %vm372, %v563, 0
        %1108 = vmatprep.subr.mxu0 0.0
        %1109 = vmatpush1.xpose.msra.mxu0 %v1103
        %1110 = vmatprep.subr.mxu0 0.0
        %1111 = vmatpush1.xpose.msra.mxu0 %v1106
        %1112 = vmatprep.subr.mxu0 0.0
        %1113 = vmatpush1.xpose.msra.mxu0 0.0
        %1114 = vmatprep.subr.mxu0 0.0
        %1115 = vmatpush1.xpose.msra.mxu0 0.0
        %1116 = vmatprep.subr.mxu0 0.0
        %1117 = vmatpush1.xpose.msra.mxu0 0.0
        %1118 = vmatprep.subr.mxu0 0.0
        %1119 = vmatpush1.xpose.msra.mxu0 0.0
        %1120 = vmatprep.subr.mxu0 0.0
        %1121 = vmatpush1.xpose.msra.mxu0 0.0
        %1122 = vmatprep.subr.mxu0 0.0
        %1123 = vmatpush1.xpose.msra.mxu0 0.0
        %1124 = vmatprep.subr.mxu0 0.0
        %1125 = vmatpush1.xpose.msra.mxu0 0.0
        %1126 = vmatprep.subr.mxu0 0.0
        %1127 = vmatpush1.xpose.msra.mxu0 0.0
        %1128 = vmatprep.subr.mxu0 0.0
        %1129 = vmatpush1.xpose.msra.mxu0 0.0
        %1130 = vmatprep.subr.mxu0 0.0
        %1131 = vmatpush1.xpose.msra.mxu0 0.0
        %1132 = vmatprep.subr.mxu0 0.0
        %1133 = vmatpush1.xpose.msra.mxu0 0.0
        %1134 = vmatprep.subr.mxu0 0.0
        %1135 = vmatpush1.xpose.msra.mxu0 0.0
        %1136 = vmatprep.subr.mxu0 0.0
        %1137 = vmatpush1.xpose.msra.mxu0 0.0
        %1138 = vmatprep.subr.mxu0 0.0
        %1139 = vmatpush1.xpose.msra.mxu0 0.0
        %1140 = vmatprep.subr.mxu0 0.0
        %1141 = vmatpush1.xpose.msra.mxu0 0.0
        %1142 = vmatprep.subr.mxu0 0.0
        %1143 = vmatpush1.xpose.msra.mxu0 0.0
        %1144 = vmatprep.subr.mxu0 0.0
        %1145 = vmatpush1.xpose.msra.mxu0 0.0
        %1146 = vmatprep.subr.mxu0 0.0
        %1147 = vmatpush1.xpose.msra.mxu0 0.0
        %1148 = vmatprep.subr.mxu0 0.0
        %1149 = vmatpush1.xpose.msra.mxu0 0.0
        %1150 = vmatprep.subr.mxu0 0.0
        %1151 = vmatpush1.xpose.msra.mxu0 0.0
        %1152 = vmatprep.subr.mxu0 0.0
        %1153 = vmatpush1.xpose.msra.mxu0 0.0
        %1154 = vmatprep.subr.mxu0 0.0
        %1155 = vmatpush1.xpose.msra.mxu0 0.0
        %1156 = vmatprep.subr.mxu0 0.0
        %1157 = vmatpush1.xpose.msra.mxu0 0.0
        %1158 = vmatprep.subr.mxu0 0.0
        %1159 = vmatpush1.xpose.msra.mxu0 0.0
        %1160 = vmatprep.subr.mxu0 0.0
        %1161 = vmatpush1.xpose.msra.mxu0 0.0
        %1162 = vmatprep.subr.mxu0 0.0
        %1163 = vmatpush1.xpose.msra.mxu0 0.0
        %1164 = vmatprep.subr.mxu0 0.0
        %1165 = vmatpush1.xpose.msra.mxu0 0.0
        %1166 = vmatprep.subr.mxu0 0.0
        %1167 = vmatpush1.xpose.msra.mxu0 0.0
        %1168 = vmatprep.subr.mxu0 0.0
        %1169 = vmatpush1.xpose.msra.mxu0 0.0
        %1170 = vmatprep.subr.mxu0 0.0
        %1171 = vmatpush1.xpose.msra.mxu0 0.0
        %1172 = vmatprep.mubr.f32.mxu0 0.0
        %1173 = vmatmul.mubr.f32.gmra.mrb[0].mxu0 %v568
        %v1174 = vpop.f32.mrb[0].mxu0
        %v1175 = vadd.f32 0.0, %v1174
        %v1176 = vpop.f32.mrb[0].mxu0
        %1177 = vdwg.mxu0
        %vm1178 = vcmask 130048
        %v1179 = vsel %vm1178, %v643, -inf
        %1180 = vmax.xlane.f32.xlu0 %v1179
        %v1181 = vpop.xlane.xlu0 %1180
        %v1182 = vsel %vm1178, %v719, -inf
        %1183 = vmax.xlane.f32.xlu0 %v1182
        %v1184 = vpop.xlane.xlu0 %1183
        %v1185 = vsel %vm1178, %v795, -inf
        %1186 = vmax.xlane.f32.xlu0 %v1185
        %v1187 = vpop.xlane.xlu0 %1186
        %v1188 = vsel %vm1178, %v871, -inf
        %1189 = vmax.xlane.f32.xlu0 %v1188
        %v1190 = vpop.xlane.xlu0 %1189
        %v1191 = vsel %vm1178, %v947, -inf
        %1192 = vmax.xlane.f32.xlu0 %v1191
        %v1193 = vpop.xlane.xlu0 %1192
        %v1194 = vsel %vm1178, %v1023, -inf
        %1195 = vmax.xlane.f32.xlu0 %v1194
        %v1196 = vpop.xlane.xlu0 %1195
        %v1197 = vsel %vm1178, %v1099, -inf
        %1198 = vmax.xlane.f32.xlu0 %v1197
        %v1199 = vpop.xlane.xlu0 %1198
        %v1200 = vsel %vm1178, %v1175, -inf
        %1201 = vmax.xlane.f32.xlu0 %v1200
        %v1202 = vpop.xlane.xlu0 %1201
        %v1203 = vsub.f32 %v643, %v1181
        %v1204 = vsub.f32 %v719, %v1184
        %v1205 = vsub.f32 %v795, %v1187
        %v1206 = vsub.f32 %v871, %v1190
        %v1207 = vsub.f32 %v947, %v1193
        %v1208 = vsub.f32 %v1023, %v1196
        %v1209 = vsub.f32 %v1099, %v1199
        %v1210 = vsub.f32 %v1175, %v1202
        %v1211 = vmul.f32 %v1203, 1.442695
        %v1212 = vpow.pop %v1211
        %v1213 = vmul.f32 %v1204, 1.442695
        %v1214 = vpow.pop %v1213
        %v1215 = vmul.f32 %v1205, 1.442695
        %v1216 = vpow.pop %v1215
        %v1217 = vmul.f32 %v1206, 1.442695
        %v1218 = vpow.pop %v1217
        %v1219 = vmul.f32 %v1207, 1.442695
        %v1220 = vpow.pop %v1219
        %v1221 = vmul.f32 %v1208, 1.442695
        %v1222 = vpow.pop %v1221
        %v1223 = vmul.f32 %v1209, 1.442695
        %v1224 = vpow.pop %v1223
        %v1225 = vmul.f32 %v1210, 1.442695
        %v1226 = vpow.pop %v1225
        %v1227 = vsel %vm1178, %v1212, 0.0
        %1228 = vadd.xlane.f32.xlu0 %v1227
        %v1229 = vpop.xlane.xlu0 %1228
        %v1230 = vsel %vm1178, %v1214, 0.0
        %1231 = vadd.xlane.f32.xlu0 %v1230
        %v1232 = vpop.xlane.xlu0 %1231
        %v1233 = vsel %vm1178, %v1216, 0.0
        %1234 = vadd.xlane.f32.xlu0 %v1233
        %v1235 = vpop.xlane.xlu0 %1234
        %v1236 = vsel %vm1178, %v1218, 0.0
        %1237 = vadd.xlane.f32.xlu0 %v1236
        %v1238 = vpop.xlane.xlu0 %1237
        %v1239 = vsel %vm1178, %v1220, 0.0
        %1240 = vadd.xlane.f32.xlu0 %v1239
        %v1241 = vpop.xlane.xlu0 %1240
        %v1242 = vsel %vm1178, %v1222, 0.0
        %1243 = vadd.xlane.f32.xlu0 %v1242
        %v1244 = vpop.xlane.xlu0 %1243
        %v1245 = vsel %vm1178, %v1224, 0.0
        %1246 = vadd.xlane.f32.xlu0 %v1245
        %v1247 = vpop.xlane.xlu0 %1246
        %v1248 = vsel %vm1178, %v1226, 0.0
        %1249 = vadd.xlane.f32.xlu0 %v1248
        %v1250 = vpop.xlane.xlu0 %1249
        %v1251 = vrcp.pop %v1229
        %v1252 = vrcp.pop %v1232
        %v1253 = vrcp.pop %v1235
        %v1254 = vrcp.pop %v1238
        %v1255 = vrcp.pop %v1241
        %v1256 = vrcp.pop %v1244
        %v1257 = vrcp.pop %v1247
        %v1258 = vrcp.pop %v1250
        %v1259 = vmul.f32 %v1212, %v1251
        %v1260 = vmul.f32 %v1214, %v1252
        %v1261 = vmul.f32 %v1216, %v1253
        %v1262 = vmul.f32 %v1218, %v1254
        %v1263 = vmul.f32 %v1220, %v1255
        %v1264 = vmul.f32 %v1222, %v1256
        %v1265 = vmul.f32 %v1224, %v1257
        %v1266 = vmul.f32 %v1226, %v1258
        %1267 = vrot.lane.b32.xlu0 %v488, 64
        %v1268 = vpop.permute.xlu0 %1267
        %1269 = vrot.lane.b32.xlu0 %v493, 64
        %v1270 = vpop.permute.xlu0 %1269
        %v1274 = vsel %vm1178, %v1259, 0
        %1276 = vmatprep.subr.mxu0 0.0
        %1277 = vmatpush1.msra.mxu0 %v1268
        %1278 = vmatprep.subr.mxu0 0.0
        %1279 = vmatpush1.msra.mxu0 %v1270
        %1280 = vmatprep.subr.mxu0 0.0
        %1281 = vmatpush1.msra.mxu0 0.0
        %1282 = vmatprep.subr.mxu0 0.0
        %1283 = vmatpush1.msra.mxu0 0.0
        %1284 = vmatprep.subr.mxu0 0.0
        %1285 = vmatpush1.msra.mxu0 0.0
        %1286 = vmatprep.subr.mxu0 0.0
        %1287 = vmatpush1.msra.mxu0 0.0
        %1288 = vmatprep.subr.mxu0 0.0
        %1289 = vmatpush1.msra.mxu0 0.0
        %1290 = vmatprep.subr.mxu0 0.0
        %1291 = vmatpush1.msra.mxu0 0.0
        %1292 = vmatprep.subr.mxu0 0.0
        %1293 = vmatpush1.msra.mxu0 0.0
        %1294 = vmatprep.subr.mxu0 0.0
        %1295 = vmatpush1.msra.mxu0 0.0
        %1296 = vmatprep.subr.mxu0 0.0
        %1297 = vmatpush1.msra.mxu0 0.0
        %1298 = vmatprep.subr.mxu0 0.0
        %1299 = vmatpush1.msra.mxu0 0.0
        %1300 = vmatprep.subr.mxu0 0.0
        %1301 = vmatpush1.msra.mxu0 0.0
        %1302 = vmatprep.subr.mxu0 0.0
        %1303 = vmatpush1.msra.mxu0 0.0
        %1304 = vmatprep.subr.mxu0 0.0
        %1305 = vmatpush1.msra.mxu0 0.0
        %1306 = vmatprep.subr.mxu0 0.0
        %1307 = vmatpush1.msra.mxu0 0.0
        %1308 = vmatprep.subr.mxu0 0.0
        %1309 = vmatpush1.msra.mxu0 0.0
        %1310 = vmatprep.subr.mxu0 0.0
        %1311 = vmatpush1.msra.mxu0 0.0
        %1312 = vmatprep.subr.mxu0 0.0
        %1313 = vmatpush1.msra.mxu0 0.0
        %1314 = vmatprep.subr.mxu0 0.0
        %1315 = vmatpush1.msra.mxu0 0.0
        %1316 = vmatprep.subr.mxu0 0.0
        %1317 = vmatpush1.msra.mxu0 0.0
        %1318 = vmatprep.subr.mxu0 0.0
        %1319 = vmatpush1.msra.mxu0 0.0
        %1320 = vmatprep.subr.mxu0 0.0
        %1321 = vmatpush1.msra.mxu0 0.0
        %1322 = vmatprep.subr.mxu0 0.0
        %1323 = vmatpush1.msra.mxu0 0.0
        %1324 = vmatprep.subr.mxu0 0.0
        %1325 = vmatpush1.msra.mxu0 0.0
        %1326 = vmatprep.subr.mxu0 0.0
        %1327 = vmatpush1.msra.mxu0 0.0
        %1328 = vmatprep.subr.mxu0 0.0
        %1329 = vmatpush1.msra.mxu0 0.0
        %1330 = vmatprep.subr.mxu0 0.0
        %1331 = vmatpush1.msra.mxu0 0.0
        %1332 = vmatprep.subr.mxu0 0.0
        %1333 = vmatpush1.msra.mxu0 0.0
        %1334 = vmatprep.subr.mxu0 0.0
        %1335 = vmatpush1.msra.mxu0 0.0
        %1336 = vmatprep.subr.mxu0 0.0
        %1337 = vmatpush1.msra.mxu0 0.0
        %1338 = vmatprep.subr.mxu0 0.0
        %1339 = vmatpush1.msra.mxu0 0.0
        %1340 = vmatprep.mubr.f32.mxu0 0.0
        %1341 = vmatmul.mubr.f32.gmra.mrb[0].mxu0 %v1274
        %v1342 = vpop.f32.mrb[0].mxu0
        %v1343 = vadd.f32 0.0, %v1342
        %v1344 = vpop.f32.mrb[0].mxu0
        %1345 = vdwg.mxu0
        %1346 = vrot.lane.b32.xlu0 %v498, 64
        %v1347 = vpop.permute.xlu0 %1346
        %1348 = vrot.lane.b32.xlu0 %v503, 64
        %v1349 = vpop.permute.xlu0 %1348
        %v1353 = vsel %vm1178, %v1260, 0
        %1355 = vmatprep.subr.mxu0 0.0
        %1356 = vmatpush1.msra.mxu0 %v1347
        %1357 = vmatprep.subr.mxu0 0.0
        %1358 = vmatpush1.msra.mxu0 %v1349
        %1359 = vmatprep.subr.mxu0 0.0
        %1360 = vmatpush1.msra.mxu0 0.0
        %1361 = vmatprep.subr.mxu0 0.0
        %1362 = vmatpush1.msra.mxu0 0.0
        %1363 = vmatprep.subr.mxu0 0.0
        %1364 = vmatpush1.msra.mxu0 0.0
        %1365 = vmatprep.subr.mxu0 0.0
        %1366 = vmatpush1.msra.mxu0 0.0
        %1367 = vmatprep.subr.mxu0 0.0
        %1368 = vmatpush1.msra.mxu0 0.0
        %1369 = vmatprep.subr.mxu0 0.0
        %1370 = vmatpush1.msra.mxu0 0.0
        %1371 = vmatprep.subr.mxu0 0.0
        %1372 = vmatpush1.msra.mxu0 0.0
        %1373 = vmatprep.subr.mxu0 0.0
        %1374 = vmatpush1.msra.mxu0 0.0
        %1375 = vmatprep.subr.mxu0 0.0
        %1376 = vmatpush1.msra.mxu0 0.0
        %1377 = vmatprep.subr.mxu0 0.0
        %1378 = vmatpush1.msra.mxu0 0.0
        %1379 = vmatprep.subr.mxu0 0.0
        %1380 = vmatpush1.msra.mxu0 0.0
        %1381 = vmatprep.subr.mxu0 0.0
        %1382 = vmatpush1.msra.mxu0 0.0
        %1383 = vmatprep.subr.mxu0 0.0
        %1384 = vmatpush1.msra.mxu0 0.0
        %1385 = vmatprep.subr.mxu0 0.0
        %1386 = vmatpush1.msra.mxu0 0.0
        %1387 = vmatprep.subr.mxu0 0.0
        %1388 = vmatpush1.msra.mxu0 0.0
        %1389 = vmatprep.subr.mxu0 0.0
        %1390 = vmatpush1.msra.mxu0 0.0
        %1391 = vmatprep.subr.mxu0 0.0
        %1392 = vmatpush1.msra.mxu0 0.0
        %1393 = vmatprep.subr.mxu0 0.0
        %1394 = vmatpush1.msra.mxu0 0.0
        %1395 = vmatprep.subr.mxu0 0.0
        %1396 = vmatpush1.msra.mxu0 0.0
        %1397 = vmatprep.subr.mxu0 0.0
        %1398 = vmatpush1.msra.mxu0 0.0
        %1399 = vmatprep.subr.mxu0 0.0
        %1400 = vmatpush1.msra.mxu0 0.0
        %1401 = vmatprep.subr.mxu0 0.0
        %1402 = vmatpush1.msra.mxu0 0.0
        %1403 = vmatprep.subr.mxu0 0.0
        %1404 = vmatpush1.msra.mxu0 0.0
        %1405 = vmatprep.subr.mxu0 0.0
        %1406 = vmatpush1.msra.mxu0 0.0
        %1407 = vmatprep.subr.mxu0 0.0
        %1408 = vmatpush1.msra.mxu0 0.0
        %1409 = vmatprep.subr.mxu0 0.0
        %1410 = vmatpush1.msra.mxu0 0.0
        %1411 = vmatprep.subr.mxu0 0.0
        %1412 = vmatpush1.msra.mxu0 0.0
        %1413 = vmatprep.subr.mxu0 0.0
        %1414 = vmatpush1.msra.mxu0 0.0
        %1415 = vmatprep.subr.mxu0 0.0
        %1416 = vmatpush1.msra.mxu0 0.0
        %1417 = vmatprep.subr.mxu0 0.0
        %1418 = vmatpush1.msra.mxu0 0.0
        %1419 = vmatprep.mubr.f32.mxu0 0.0
        %1420 = vmatmul.mubr.f32.gmra.mrb[0].mxu0 %v1353
        %v1421 = vpop.f32.mrb[0].mxu0
        %v1422 = vadd.f32 0.0, %v1421
        %v1423 = vpop.f32.mrb[0].mxu0
        %1424 = vdwg.mxu0
        %1425 = vrot.lane.b32.xlu0 %v508, 64
        %v1426 = vpop.permute.xlu0 %1425
        %1427 = vrot.lane.b32.xlu0 %v513, 64
        %v1428 = vpop.permute.xlu0 %1427
        %v1432 = vsel %vm1178, %v1261, 0
        %1434 = vmatprep.subr.mxu0 0.0
        %1435 = vmatpush1.msra.mxu0 %v1426
        %1436 = vmatprep.subr.mxu0 0.0
        %1437 = vmatpush1.msra.mxu0 %v1428
        %1438 = vmatprep.subr.mxu0 0.0
        %1439 = vmatpush1.msra.mxu0 0.0
        %1440 = vmatprep.subr.mxu0 0.0
        %1441 = vmatpush1.msra.mxu0 0.0
        %1442 = vmatprep.subr.mxu0 0.0
        %1443 = vmatpush1.msra.mxu0 0.0
        %1444 = vmatprep.subr.mxu0 0.0
        %1445 = vmatpush1.msra.mxu0 0.0
        %1446 = vmatprep.subr.mxu0 0.0
        %1447 = vmatpush1.msra.mxu0 0.0
        %1448 = vmatprep.subr.mxu0 0.0
        %1449 = vmatpush1.msra.mxu0 0.0
        %1450 = vmatprep.subr.mxu0 0.0
        %1451 = vmatpush1.msra.mxu0 0.0
        %1452 = vmatprep.subr.mxu0 0.0
        %1453 = vmatpush1.msra.mxu0 0.0
        %1454 = vmatprep.subr.mxu0 0.0
        %1455 = vmatpush1.msra.mxu0 0.0
        %1456 = vmatprep.subr.mxu0 0.0
        %1457 = vmatpush1.msra.mxu0 0.0
        %1458 = vmatprep.subr.mxu0 0.0
        %1459 = vmatpush1.msra.mxu0 0.0
        %1460 = vmatprep.subr.mxu0 0.0
        %1461 = vmatpush1.msra.mxu0 0.0
        %1462 = vmatprep.subr.mxu0 0.0
        %1463 = vmatpush1.msra.mxu0 0.0
        %1464 = vmatprep.subr.mxu0 0.0
        %1465 = vmatpush1.msra.mxu0 0.0
        %1466 = vmatprep.subr.mxu0 0.0
        %1467 = vmatpush1.msra.mxu0 0.0
        %1468 = vmatprep.subr.mxu0 0.0
        %1469 = vmatpush1.msra.mxu0 0.0
        %1470 = vmatprep.subr.mxu0 0.0
        %1471 = vmatpush1.msra.mxu0 0.0
        %1472 = vmatprep.subr.mxu0 0.0
        %1473 = vmatpush1.msra.mxu0 0.0
        %1474 = vmatprep.subr.mxu0 0.0
        %1475 = vmatpush1.msra.mxu0 0.0
        %1476 = vmatprep.subr.mxu0 0.0
        %1477 = vmatpush1.msra.mxu0 0.0
        %1478 = vmatprep.subr.mxu0 0.0
        %1479 = vmatpush1.msra.mxu0 0.0
        %1480 = vmatprep.subr.mxu0 0.0
        %1481 = vmatpush1.msra.mxu0 0.0
        %1482 = vmatprep.subr.mxu0 0.0
        %1483 = vmatpush1.msra.mxu0 0.0
        %1484 = vmatprep.subr.mxu0 0.0
        %1485 = vmatpush1.msra.mxu0 0.0
        %1486 = vmatprep.subr.mxu0 0.0
        %1487 = vmatpush1.msra.mxu0 0.0
        %1488 = vmatprep.subr.mxu0 0.0
        %1489 = vmatpush1.msra.mxu0 0.0
        %1490 = vmatprep.subr.mxu0 0.0
        %1491 = vmatpush1.msra.mxu0 0.0
        %1492 = vmatprep.subr.mxu0 0.0
        %1493 = vmatpush1.msra.mxu0 0.0
        %1494 = vmatprep.subr.mxu0 0.0
        %1495 = vmatpush1.msra.mxu0 0.0
        %1496 = vmatprep.subr.mxu0 0.0
        %1497 = vmatpush1.msra.mxu0 0.0
        %1498 = vmatprep.mubr.f32.mxu0 0.0
        %1499 = vmatmul.mubr.f32.gmra.mrb[0].mxu0 %v1432
        %v1500 = vpop.f32.mrb[0].mxu0
        %v1501 = vadd.f32 0.0, %v1500
        %v1502 = vpop.f32.mrb[0].mxu0
        %1503 = vdwg.mxu0
        %1504 = vrot.lane.b32.xlu0 %v518, 64
        %v1505 = vpop.permute.xlu0 %1504
        %1506 = vrot.lane.b32.xlu0 %v523, 64
        %v1507 = vpop.permute.xlu0 %1506
        %v1511 = vsel %vm1178, %v1262, 0
        %1513 = vmatprep.subr.mxu0 0.0
        %1514 = vmatpush1.msra.mxu0 %v1505
        %1515 = vmatprep.subr.mxu0 0.0
        %1516 = vmatpush1.msra.mxu0 %v1507
        %1517 = vmatprep.subr.mxu0 0.0
        %1518 = vmatpush1.msra.mxu0 0.0
        %1519 = vmatprep.subr.mxu0 0.0
        %1520 = vmatpush1.msra.mxu0 0.0
        %1521 = vmatprep.subr.mxu0 0.0
        %1522 = vmatpush1.msra.mxu0 0.0
        %1523 = vmatprep.subr.mxu0 0.0
        %1524 = vmatpush1.msra.mxu0 0.0
        %1525 = vmatprep.subr.mxu0 0.0
        %1526 = vmatpush1.msra.mxu0 0.0
        %1527 = vmatprep.subr.mxu0 0.0
        %1528 = vmatpush1.msra.mxu0 0.0
        %1529 = vmatprep.subr.mxu0 0.0
        %1530 = vmatpush1.msra.mxu0 0.0
        %1531 = vmatprep.subr.mxu0 0.0
        %1532 = vmatpush1.msra.mxu0 0.0
        %1533 = vmatprep.subr.mxu0 0.0
        %1534 = vmatpush1.msra.mxu0 0.0
        %1535 = vmatprep.subr.mxu0 0.0
        %1536 = vmatpush1.msra.mxu0 0.0
        %1537 = vmatprep.subr.mxu0 0.0
        %1538 = vmatpush1.msra.mxu0 0.0
        %1539 = vmatprep.subr.mxu0 0.0
        %1540 = vmatpush1.msra.mxu0 0.0
        %1541 = vmatprep.subr.mxu0 0.0
        %1542 = vmatpush1.msra.mxu0 0.0
        %1543 = vmatprep.subr.mxu0 0.0
        %1544 = vmatpush1.msra.mxu0 0.0
        %1545 = vmatprep.subr.mxu0 0.0
        %1546 = vmatpush1.msra.mxu0 0.0
        %1547 = vmatprep.subr.mxu0 0.0
        %1548 = vmatpush1.msra.mxu0 0.0
        %1549 = vmatprep.subr.mxu0 0.0
        %1550 = vmatpush1.msra.mxu0 0.0
        %1551 = vmatprep.subr.mxu0 0.0
        %1552 = vmatpush1.msra.mxu0 0.0
        %1553 = vmatprep.subr.mxu0 0.0
        %1554 = vmatpush1.msra.mxu0 0.0
        %1555 = vmatprep.subr.mxu0 0.0
        %1556 = vmatpush1.msra.mxu0 0.0
        %1557 = vmatprep.subr.mxu0 0.0
        %1558 = vmatpush1.msra.mxu0 0.0
        %1559 = vmatprep.subr.mxu0 0.0
        %1560 = vmatpush1.msra.mxu0 0.0
        %1561 = vmatprep.subr.mxu0 0.0
        %1562 = vmatpush1.msra.mxu0 0.0
        %1563 = vmatprep.subr.mxu0 0.0
        %1564 = vmatpush1.msra.mxu0 0.0
        %1565 = vmatprep.subr.mxu0 0.0
        %1566 = vmatpush1.msra.mxu0 0.0
        %1567 = vmatprep.subr.mxu0 0.0
        %1568 = vmatpush1.msra.mxu0 0.0
        %1569 = vmatprep.subr.mxu0 0.0
        %1570 = vmatpush1.msra.mxu0 0.0
        %1571 = vmatprep.subr.mxu0 0.0
        %1572 = vmatpush1.msra.mxu0 0.0
        %1573 = vmatprep.subr.mxu0 0.0
        %1574 = vmatpush1.msra.mxu0 0.0
        %1575 = vmatprep.subr.mxu0 0.0
        %1576 = vmatpush1.msra.mxu0 0.0
        %1577 = vmatprep.mubr.f32.mxu0 0.0
        %1578 = vmatmul.mubr.f32.gmra.mrb[0].mxu0 %v1511
        %v1579 = vpop.f32.mrb[0].mxu0
        %v1580 = vadd.f32 0.0, %v1579
        %v1581 = vpop.f32.mrb[0].mxu0
        %1582 = vdwg.mxu0
        %1583 = vrot.lane.b32.xlu0 %v528, 64
        %v1584 = vpop.permute.xlu0 %1583
        %1585 = vrot.lane.b32.xlu0 %v533, 64
        %v1586 = vpop.permute.xlu0 %1585
        %v1590 = vsel %vm1178, %v1263, 0
        %1592 = vmatprep.subr.mxu0 0.0
        %1593 = vmatpush1.msra.mxu0 %v1584
        %1594 = vmatprep.subr.mxu0 0.0
        %1595 = vmatpush1.msra.mxu0 %v1586
        %1596 = vmatprep.subr.mxu0 0.0
        %1597 = vmatpush1.msra.mxu0 0.0
        %1598 = vmatprep.subr.mxu0 0.0
        %1599 = vmatpush1.msra.mxu0 0.0
        %1600 = vmatprep.subr.mxu0 0.0
        %1601 = vmatpush1.msra.mxu0 0.0
        %1602 = vmatprep.subr.mxu0 0.0
        %1603 = vmatpush1.msra.mxu0 0.0
        %1604 = vmatprep.subr.mxu0 0.0
        %1605 = vmatpush1.msra.mxu0 0.0
        %1606 = vmatprep.subr.mxu0 0.0
        %1607 = vmatpush1.msra.mxu0 0.0
        %1608 = vmatprep.subr.mxu0 0.0
        %1609 = vmatpush1.msra.mxu0 0.0
        %1610 = vmatprep.subr.mxu0 0.0
        %1611 = vmatpush1.msra.mxu0 0.0
        %1612 = vmatprep.subr.mxu0 0.0
        %1613 = vmatpush1.msra.mxu0 0.0
        %1614 = vmatprep.subr.mxu0 0.0
        %1615 = vmatpush1.msra.mxu0 0.0
        %1616 = vmatprep.subr.mxu0 0.0
        %1617 = vmatpush1.msra.mxu0 0.0
        %1618 = vmatprep.subr.mxu0 0.0
        %1619 = vmatpush1.msra.mxu0 0.0
        %1620 = vmatprep.subr.mxu0 0.0
        %1621 = vmatpush1.msra.mxu0 0.0
        %1622 = vmatprep.subr.mxu0 0.0
        %1623 = vmatpush1.msra.mxu0 0.0
        %1624 = vmatprep.subr.mxu0 0.0
        %1625 = vmatpush1.msra.mxu0 0.0
        %1626 = vmatprep.subr.mxu0 0.0
        %1627 = vmatpush1.msra.mxu0 0.0
        %1628 = vmatprep.subr.mxu0 0.0
        %1629 = vmatpush1.msra.mxu0 0.0
        %1630 = vmatprep.subr.mxu0 0.0
        %1631 = vmatpush1.msra.mxu0 0.0
        %1632 = vmatprep.subr.mxu0 0.0
        %1633 = vmatpush1.msra.mxu0 0.0
        %1634 = vmatprep.subr.mxu0 0.0
        %1635 = vmatpush1.msra.mxu0 0.0
        %1636 = vmatprep.subr.mxu0 0.0
        %1637 = vmatpush1.msra.mxu0 0.0
        %1638 = vmatprep.subr.mxu0 0.0
        %1639 = vmatpush1.msra.mxu0 0.0
        %1640 = vmatprep.subr.mxu0 0.0
        %1641 = vmatpush1.msra.mxu0 0.0
        %1642 = vmatprep.subr.mxu0 0.0
        %1643 = vmatpush1.msra.mxu0 0.0
        %1644 = vmatprep.subr.mxu0 0.0
        %1645 = vmatpush1.msra.mxu0 0.0
        %1646 = vmatprep.subr.mxu0 0.0
        %1647 = vmatpush1.msra.mxu0 0.0
        %1648 = vmatprep.subr.mxu0 0.0
        %1649 = vmatpush1.msra.mxu0 0.0
        %1650 = vmatprep.subr.mxu0 0.0
        %1651 = vmatpush1.msra.mxu0 0.0
        %1652 = vmatprep.subr.mxu0 0.0
        %1653 = vmatpush1.msra.mxu0 0.0
        %1654 = vmatprep.subr.mxu0 0.0
        %1655 = vmatpush1.msra.mxu0 0.0
        %1656 = vmatprep.mubr.f32.mxu0 0.0
        %1657 = vmatmul.mubr.f32.gmra.mrb[0].mxu0 %v1590
        %v1658 = vpop.f32.mrb[0].mxu0
        %v1659 = vadd.f32 0.0, %v1658
        %v1660 = vpop.f32.mrb[0].mxu0
        %1661 = vdwg.mxu0
        %1662 = vrot.lane.b32.xlu0 %v538, 64
        %v1663 = vpop.permute.xlu0 %1662
        %1664 = vrot.lane.b32.xlu0 %v543, 64
        %v1665 = vpop.permute.xlu0 %1664
        %v1669 = vsel %vm1178, %v1264, 0
        %1671 = vmatprep.subr.mxu0 0.0
        %1672 = vmatpush1.msra.mxu0 %v1663
        %1673 = vmatprep.subr.mxu0 0.0
        %1674 = vmatpush1.msra.mxu0 %v1665
        %1675 = vmatprep.subr.mxu0 0.0
        %1676 = vmatpush1.msra.mxu0 0.0
        %1677 = vmatprep.subr.mxu0 0.0
        %1678 = vmatpush1.msra.mxu0 0.0
        %1679 = vmatprep.subr.mxu0 0.0
        %1680 = vmatpush1.msra.mxu0 0.0
        %1681 = vmatprep.subr.mxu0 0.0
        %1682 = vmatpush1.msra.mxu0 0.0
        %1683 = vmatprep.subr.mxu0 0.0
        %1684 = vmatpush1.msra.mxu0 0.0
        %1685 = vmatprep.subr.mxu0 0.0
        %1686 = vmatpush1.msra.mxu0 0.0
        %1687 = vmatprep.subr.mxu0 0.0
        %1688 = vmatpush1.msra.mxu0 0.0
        %1689 = vmatprep.subr.mxu0 0.0
        %1690 = vmatpush1.msra.mxu0 0.0
        %1691 = vmatprep.subr.mxu0 0.0
        %1692 = vmatpush1.msra.mxu0 0.0
        %1693 = vmatprep.subr.mxu0 0.0
        %1694 = vmatpush1.msra.mxu0 0.0
        %1695 = vmatprep.subr.mxu0 0.0
        %1696 = vmatpush1.msra.mxu0 0.0
        %1697 = vmatprep.subr.mxu0 0.0
        %1698 = vmatpush1.msra.mxu0 0.0
        %1699 = vmatprep.subr.mxu0 0.0
        %1700 = vmatpush1.msra.mxu0 0.0
        %1701 = vmatprep.subr.mxu0 0.0
        %1702 = vmatpush1.msra.mxu0 0.0
        %1703 = vmatprep.subr.mxu0 0.0
        %1704 = vmatpush1.msra.mxu0 0.0
        %1705 = vmatprep.subr.mxu0 0.0
        %1706 = vmatpush1.msra.mxu0 0.0
        %1707 = vmatprep.subr.mxu0 0.0
        %1708 = vmatpush1.msra.mxu0 0.0
        %1709 = vmatprep.subr.mxu0 0.0
        %1710 = vmatpush1.msra.mxu0 0.0
        %1711 = vmatprep.subr.mxu0 0.0
        %1712 = vmatpush1.msra.mxu0 0.0
        %1713 = vmatprep.subr.mxu0 0.0
        %1714 = vmatpush1.msra.mxu0 0.0
        %1715 = vmatprep.subr.mxu0 0.0
        %1716 = vmatpush1.msra.mxu0 0.0
        %1717 = vmatprep.subr.mxu0 0.0
        %1718 = vmatpush1.msra.mxu0 0.0
        %1719 = vmatprep.subr.mxu0 0.0
        %1720 = vmatpush1.msra.mxu0 0.0
        %1721 = vmatprep.subr.mxu0 0.0
        %1722 = vmatpush1.msra.mxu0 0.0
        %1723 = vmatprep.subr.mxu0 0.0
        %1724 = vmatpush1.msra.mxu0 0.0
        %1725 = vmatprep.subr.mxu0 0.0
        %1726 = vmatpush1.msra.mxu0 0.0
        %1727 = vmatprep.subr.mxu0 0.0
        %1728 = vmatpush1.msra.mxu0 0.0
        %1729 = vmatprep.subr.mxu0 0.0
        %1730 = vmatpush1.msra.mxu0 0.0
        %1731 = vmatprep.subr.mxu0 0.0
        %1732 = vmatpush1.msra.mxu0 0.0
        %1733 = vmatprep.subr.mxu0 0.0
        %1734 = vmatpush1.msra.mxu0 0.0
        %1735 = vmatprep.mubr.f32.mxu0 0.0
        %1736 = vmatmul.mubr.f32.gmra.mrb[0].mxu0 %v1669
        %v1737 = vpop.f32.mrb[0].mxu0
        %v1738 = vadd.f32 0.0, %v1737
        %v1739 = vpop.f32.mrb[0].mxu0
        %1740 = vdwg.mxu0
        %1741 = vrot.lane.b32.xlu0 %v548, 64
        %v1742 = vpop.permute.xlu0 %1741
        %1743 = vrot.lane.b32.xlu0 %v553, 64
        %v1744 = vpop.permute.xlu0 %1743
        %v1748 = vsel %vm1178, %v1265, 0
        %1750 = vmatprep.subr.mxu0 0.0
        %1751 = vmatpush1.msra.mxu0 %v1742
        %1752 = vmatprep.subr.mxu0 0.0
        %1753 = vmatpush1.msra.mxu0 %v1744
        %1754 = vmatprep.subr.mxu0 0.0
        %1755 = vmatpush1.msra.mxu0 0.0
        %1756 = vmatprep.subr.mxu0 0.0
        %1757 = vmatpush1.msra.mxu0 0.0
        %1758 = vmatprep.subr.mxu0 0.0
        %1759 = vmatpush1.msra.mxu0 0.0
        %1760 = vmatprep.subr.mxu0 0.0
        %1761 = vmatpush1.msra.mxu0 0.0
        %1762 = vmatprep.subr.mxu0 0.0
        %1763 = vmatpush1.msra.mxu0 0.0
        %1764 = vmatprep.subr.mxu0 0.0
        %1765 = vmatpush1.msra.mxu0 0.0
        %1766 = vmatprep.subr.mxu0 0.0
        %1767 = vmatpush1.msra.mxu0 0.0
        %1768 = vmatprep.subr.mxu0 0.0
        %1769 = vmatpush1.msra.mxu0 0.0
        %1770 = vmatprep.subr.mxu0 0.0
        %1771 = vmatpush1.msra.mxu0 0.0
        %1772 = vmatprep.subr.mxu0 0.0
        %1773 = vmatpush1.msra.mxu0 0.0
        %1774 = vmatprep.subr.mxu0 0.0
        %1775 = vmatpush1.msra.mxu0 0.0
        %1776 = vmatprep.subr.mxu0 0.0
        %1777 = vmatpush1.msra.mxu0 0.0
        %1778 = vmatprep.subr.mxu0 0.0
        %1779 = vmatpush1.msra.mxu0 0.0
        %1780 = vmatprep.subr.mxu0 0.0
        %1781 = vmatpush1.msra.mxu0 0.0
        %1782 = vmatprep.subr.mxu0 0.0
        %1783 = vmatpush1.msra.mxu0 0.0
        %1784 = vmatprep.subr.mxu0 0.0
        %1785 = vmatpush1.msra.mxu0 0.0
        %1786 = vmatprep.subr.mxu0 0.0
        %1787 = vmatpush1.msra.mxu0 0.0
        %1788 = vmatprep.subr.mxu0 0.0
        %1789 = vmatpush1.msra.mxu0 0.0
        %1790 = vmatprep.subr.mxu0 0.0
        %1791 = vmatpush1.msra.mxu0 0.0
        %1792 = vmatprep.subr.mxu0 0.0
        %1793 = vmatpush1.msra.mxu0 0.0
        %1794 = vmatprep.subr.mxu0 0.0
        %1795 = vmatpush1.msra.mxu0 0.0
        %1796 = vmatprep.subr.mxu0 0.0
        %1797 = vmatpush1.msra.mxu0 0.0
        %1798 = vmatprep.subr.mxu0 0.0
        %1799 = vmatpush1.msra.mxu0 0.0
        %1800 = vmatprep.subr.mxu0 0.0
        %1801 = vmatpush1.msra.mxu0 0.0
        %1802 = vmatprep.subr.mxu0 0.0
        %1803 = vmatpush1.msra.mxu0 0.0
        %1804 = vmatprep.subr.mxu0 0.0
        %1805 = vmatpush1.msra.mxu0 0.0
        %1806 = vmatprep.subr.mxu0 0.0
        %1807 = vmatpush1.msra.mxu0 0.0
        %1808 = vmatprep.subr.mxu0 0.0
        %1809 = vmatpush1.msra.mxu0 0.0
        %1810 = vmatprep.subr.mxu0 0.0
        %1811 = vmatpush1.msra.mxu0 0.0
        %1812 = vmatprep.subr.mxu0 0.0
        %1813 = vmatpush1.msra.mxu0 0.0
        %1814 = vmatprep.mubr.f32.mxu0 0.0
        %1815 = vmatmul.mubr.f32.gmra.mrb[0].mxu0 %v1748
        %v1816 = vpop.f32.mrb[0].mxu0
        %v1817 = vadd.f32 0.0, %v1816
        %v1818 = vpop.f32.mrb[0].mxu0
        %1819 = vdwg.mxu0
        %1820 = vrot.lane.b32.xlu0 %v558, 64
        %v1821 = vpop.permute.xlu0 %1820
        %1822 = vrot.lane.b32.xlu0 %v563, 64
        %v1823 = vpop.permute.xlu0 %1822
        %v1827 = vsel %vm1178, %v1266, 0
        %1829 = vmatprep.subr.mxu0 0.0
        %1830 = vmatpush1.msra.mxu0 %v1821
        %1831 = vmatprep.subr.mxu0 0.0
        %1832 = vmatpush1.msra.mxu0 %v1823
        %1833 = vmatprep.subr.mxu0 0.0
        %1834 = vmatpush1.msra.mxu0 0.0
        %1835 = vmatprep.subr.mxu0 0.0
        %1836 = vmatpush1.msra.mxu0 0.0
        %1837 = vmatprep.subr.mxu0 0.0
        %1838 = vmatpush1.msra.mxu0 0.0
        %1839 = vmatprep.subr.mxu0 0.0
        %1840 = vmatpush1.msra.mxu0 0.0
        %1841 = vmatprep.subr.mxu0 0.0
        %1842 = vmatpush1.msra.mxu0 0.0
        %1843 = vmatprep.subr.mxu0 0.0
        %1844 = vmatpush1.msra.mxu0 0.0
        %1845 = vmatprep.subr.mxu0 0.0
        %1846 = vmatpush1.msra.mxu0 0.0
        %1847 = vmatprep.subr.mxu0 0.0
        %1848 = vmatpush1.msra.mxu0 0.0
        %1849 = vmatprep.subr.mxu0 0.0
        %1850 = vmatpush1.msra.mxu0 0.0
        %1851 = vmatprep.subr.mxu0 0.0
        %1852 = vmatpush1.msra.mxu0 0.0
        %1853 = vmatprep.subr.mxu0 0.0
        %1854 = vmatpush1.msra.mxu0 0.0
        %1855 = vmatprep.subr.mxu0 0.0
        %1856 = vmatpush1.msra.mxu0 0.0
        %1857 = vmatprep.subr.mxu0 0.0
        %1858 = vmatpush1.msra.mxu0 0.0
        %1859 = vmatprep.subr.mxu0 0.0
        %1860 = vmatpush1.msra.mxu0 0.0
        %1861 = vmatprep.subr.mxu0 0.0
        %1862 = vmatpush1.msra.mxu0 0.0
        %1863 = vmatprep.subr.mxu0 0.0
        %1864 = vmatpush1.msra.mxu0 0.0
        %1865 = vmatprep.subr.mxu0 0.0
        %1866 = vmatpush1.msra.mxu0 0.0
        %1867 = vmatprep.subr.mxu0 0.0
        %1868 = vmatpush1.msra.mxu0 0.0
        %1869 = vmatprep.subr.mxu0 0.0
        %1870 = vmatpush1.msra.mxu0 0.0
        %1871 = vmatprep.subr.mxu0 0.0
        %1872 = vmatpush1.msra.mxu0 0.0
        %1873 = vmatprep.subr.mxu0 0.0
        %1874 = vmatpush1.msra.mxu0 0.0
        %1875 = vmatprep.subr.mxu0 0.0
        %1876 = vmatpush1.msra.mxu0 0.0
        %1877 = vmatprep.subr.mxu0 0.0
        %1878 = vmatpush1.msra.mxu0 0.0
        %1879 = vmatprep.subr.mxu0 0.0
        %1880 = vmatpush1.msra.mxu0 0.0
        %1881 = vmatprep.subr.mxu0 0.0
        %1882 = vmatpush1.msra.mxu0 0.0
        %1883 = vmatprep.subr.mxu0 0.0
        %1884 = vmatpush1.msra.mxu0 0.0
        %1885 = vmatprep.subr.mxu0 0.0
        %1886 = vmatpush1.msra.mxu0 0.0
        %1887 = vmatprep.subr.mxu0 0.0
        %1888 = vmatpush1.msra.mxu0 0.0
        %1889 = vmatprep.subr.mxu0 0.0
        %1890 = vmatpush1.msra.mxu0 0.0
        %1891 = vmatprep.subr.mxu0 0.0
        %1892 = vmatpush1.msra.mxu0 0.0
        %1893 = vmatprep.mubr.f32.mxu0 0.0
        %1894 = vmatmul.mubr.f32.gmra.mrb[0].mxu0 %v1827
        %v1895 = vpop.f32.mrb[0].mxu0
        %v1896 = vadd.f32 0.0, %v1895
        %v1897 = vpop.f32.mrb[0].mxu0
        %1898 = vdwg.mxu0
        %v1899 = vld [vmem:[#allocation7] sm:$0xff]
        %v1900 = vmul.f32 %v1343, %v1899
        %v1901 = vmul.f32 %v1422, %v1899
        %v1902 = vmul.f32 %v1501, %v1899
        %v1903 = vmul.f32 %v1580, %v1899
        %v1904 = vmul.f32 %v1659, %v1899
        %v1905 = vmul.f32 %v1738, %v1899
        %v1906 = vmul.f32 %v1817, %v1899
        %v1907 = vmul.f32 %v1896, %v1899
        %v1908 = vsel %vm372, %v1900, 0.0
        %v1909 = vrot.slane %v1908, 4
        %v1910 = vadd.f32 %v1908, %v1909
        %v1911 = vrot.slane %v1910, 2
        %v1912 = vadd.f32 %v1910, %v1911
        %v1913 = vrot.slane %v1912, 1
        %v1914 = vadd.f32 %v1912, %v1913
        %v1915 = vsel %vm372, %v1901, 0.0
        %v1916 = vrot.slane %v1915, 4
        %v1917 = vadd.f32 %v1915, %v1916
        %v1918 = vrot.slane %v1917, 2
        %v1919 = vadd.f32 %v1917, %v1918
        %v1920 = vrot.slane %v1919, 1
        %v1921 = vadd.f32 %v1919, %v1920
        %v1922 = vsel %vm372, %v1902, 0.0
        %v1923 = vrot.slane %v1922, 4
        %v1924 = vadd.f32 %v1922, %v1923
        %v1925 = vrot.slane %v1924, 2
        %v1926 = vadd.f32 %v1924, %v1925
        %v1927 = vrot.slane %v1926, 1
        %v1928 = vadd.f32 %v1926, %v1927
        %v1929 = vsel %vm372, %v1903, 0.0
        %v1930 = vrot.slane %v1929, 4
        %v1931 = vadd.f32 %v1929, %v1930
        %v1932 = vrot.slane %v1931, 2
        %v1933 = vadd.f32 %v1931, %v1932
        %v1934 = vrot.slane %v1933, 1
        %v1935 = vadd.f32 %v1933, %v1934
        %v1936 = vsel %vm372, %v1904, 0.0
        %v1937 = vrot.slane %v1936, 4
        %v1938 = vadd.f32 %v1936, %v1937
        %v1939 = vrot.slane %v1938, 2
        %v1940 = vadd.f32 %v1938, %v1939
        %v1941 = vrot.slane %v1940, 1
        %v1942 = vadd.f32 %v1940, %v1941
        %v1943 = vsel %vm372, %v1905, 0.0
        %v1944 = vrot.slane %v1943, 4
        %v1945 = vadd.f32 %v1943, %v1944
        %v1946 = vrot.slane %v1945, 2
        %v1947 = vadd.f32 %v1945, %v1946
        %v1948 = vrot.slane %v1947, 1
        %v1949 = vadd.f32 %v1947, %v1948
        %v1950 = vsel %vm372, %v1906, 0.0
        %v1951 = vrot.slane %v1950, 4
        %v1952 = vadd.f32 %v1950, %v1951
        %v1953 = vrot.slane %v1952, 2
        %v1954 = vadd.f32 %v1952, %v1953
        %v1955 = vrot.slane %v1954, 1
        %v1956 = vadd.f32 %v1954, %v1955
        %v1957 = vsel %vm372, %v1907, 0.0
        %v1958 = vrot.slane %v1957, 4
        %v1959 = vadd.f32 %v1957, %v1958
        %v1960 = vrot.slane %v1959, 2
        %v1961 = vadd.f32 %v1959, %v1960
        %v1962 = vrot.slane %v1961, 1
        %v1963 = vadd.f32 %v1961, %v1962
        %v1964 = vld [vmem:[#allocation8] sm:$0xff]
        %v1965 = vld [vmem:[#allocation8 + $0x8] sm:$0xff]
        %v1966 = vld [vmem:[#allocation8 + $0x10] sm:$0xff]
        %v1967 = vld [vmem:[#allocation8 + $0x18] sm:$0xff]
        %v1968 = vld [vmem:[#allocation8 + $0x20] sm:$0xff]
        %v1969 = vld [vmem:[#allocation8 + $0x28] sm:$0xff]
        %v1970 = vld [vmem:[#allocation8 + $0x30] sm:$0xff]
        %v1971 = vld [vmem:[#allocation8 + $0x38] sm:$0xff]
        %v1972 = vld [vmem:[%s6] sm:$0x1]
        %v1974 = vlaneseq
        %v1975 = vshrl.u32 %v1974, 7
        %v1976 = vsub.s32 0, %v1975
        %v1977 = vrot.slane %v1972, %v1976
        %vm1987 = vcmask 1041409
        %v1988 = vsel %vm1987, %v1921, %v1914
        %vm1989 = vcmask 1042434
        %v1990 = vsel %vm1989, %v1928, %v1988
        %vm1991 = vcmask 1043459
        %v1992 = vsel %vm1991, %v1935, %v1990
        %vm1993 = vcmask 1044484
        %v1994 = vsel %vm1993, %v1942, %v1992
        %vm1995 = vcmask 1045509
        %v1996 = vsel %vm1995, %v1949, %v1994
        %vm1997 = vcmask 1046534
        %v1998 = vsel %vm1997, %v1956, %v1996
        %vm1999 = vcmask 1047559
        %v2000 = vsel %vm1999, %v1963, %v1998
        %v2001 = vsel %vm372, %v2000, 0
        %2003 = vmatprep.subr.mxu0 0.0
        %2004 = vmatpush1.msra.mxu0 %v1964
        %2005 = vmatprep.subr.mxu0 0.0
        %2006 = vmatpush1.msra.mxu0 %v1965
        %2007 = vmatprep.subr.mxu0 0.0
        %2008 = vmatpush1.msra.mxu0 %v1966
        %2009 = vmatprep.subr.mxu0 0.0
        %2010 = vmatpush1.msra.mxu0 %v1967
        %2011 = vmatprep.subr.mxu0 0.0
        %2012 = vmatpush1.msra.mxu0 %v1968
        %2013 = vmatprep.subr.mxu0 0.0
        %2014 = vmatpush1.msra.mxu0 %v1969
        %2015 = vmatprep.subr.mxu0 0.0
        %2016 = vmatpush1.msra.mxu0 %v1970
        %2017 = vmatprep.subr.mxu0 0.0
        %2018 = vmatpush1.msra.mxu0 %v1971
        %2019 = vmatprep.subr.mxu0 0.0
        %2020 = vmatpush1.msra.mxu0 0.0
        %2021 = vmatprep.subr.mxu0 0.0
        %2022 = vmatpush1.msra.mxu0 0.0
        %2023 = vmatprep.subr.mxu0 0.0
        %2024 = vmatpush1.msra.mxu0 0.0
        %2025 = vmatprep.subr.mxu0 0.0
        %2026 = vmatpush1.msra.mxu0 0.0
        %2027 = vmatprep.subr.mxu0 0.0
        %2028 = vmatpush1.msra.mxu0 0.0
        %2029 = vmatprep.subr.mxu0 0.0
        %2030 = vmatpush1.msra.mxu0 0.0
        %2031 = vmatprep.subr.mxu0 0.0
        %2032 = vmatpush1.msra.mxu0 0.0
        %2033 = vmatprep.subr.mxu0 0.0
        %2034 = vmatpush1.msra.mxu0 0.0
        %2035 = vmatprep.subr.mxu0 0.0
        %2036 = vmatpush1.msra.mxu0 0.0
        %2037 = vmatprep.subr.mxu0 0.0
        %2038 = vmatpush1.msra.mxu0 0.0
        %2039 = vmatprep.subr.mxu0 0.0
        %2040 = vmatpush1.msra.mxu0 0.0
        %2041 = vmatprep.subr.mxu0 0.0
        %2042 = vmatpush1.msra.mxu0 0.0
        %2043 = vmatprep.subr.mxu0 0.0
        %2044 = vmatpush1.msra.mxu0 0.0
        %2045 = vmatprep.subr.mxu0 0.0
        %2046 = vmatpush1.msra.mxu0 0.0
        %2047 = vmatprep.subr.mxu0 0.0
        %2048 = vmatpush1.msra.mxu0 0.0
        %2049 = vmatprep.subr.mxu0 0.0
        %2050 = vmatpush1.msra.mxu0 0.0
        %2051 = vmatprep.subr.mxu0 0.0
        %2052 = vmatpush1.msra.mxu0 0.0
        %2053 = vmatprep.subr.mxu0 0.0
        %2054 = vmatpush1.msra.mxu0 0.0
        %2055 = vmatprep.subr.mxu0 0.0
        %2056 = vmatpush1.msra.mxu0 0.0
        %2057 = vmatprep.subr.mxu0 0.0
        %2058 = vmatpush1.msra.mxu0 0.0
        %2059 = vmatprep.subr.mxu0 0.0
        %2060 = vmatpush1.msra.mxu0 0.0
        %2061 = vmatprep.subr.mxu0 0.0
        %2062 = vmatpush1.msra.mxu0 0.0
        %2063 = vmatprep.subr.mxu0 0.0
        %2064 = vmatpush1.msra.mxu0 0.0
        %2065 = vmatprep.subr.mxu0 0.0
        %2066 = vmatpush1.msra.mxu0 0.0
        %2067 = vmatprep.mubr.f32.mxu0 0.0
        %2068 = vmatmul.mubr.f32.gmra.mrb[0].mxu0 %v2001
        %v2069 = vpop.f32.mrb[0].mxu0
        %v2070 = vadd.f32 %v1977, %v2069
        %v2071 = vpop.f32.mrb[0].mxu0
        %2072 = vdwg.mxu0
        %2073 = vst.msk [vmem:[%s339] sm:$0xff] %vm372, %v2070
        %s2074 = sand.u32 %s186, 1
        %s2075 = scalar_lea.sflag [#allocation4], %s2074
        %s2076 = sand.u32 %s186, 1
        %s2077 = smul.addr %s2076, 8
        %s2078 = scalar_lea.vmem [#allocation10], %s2077
        // Predicated region
        $region65: #{tpu_custom_call.1} parent=47 // pred_check
          %p2079 = pneg %p196
        $region66: #{tpu_custom_call.1} parent=47 // pred_check_branch
          %2081 = sbr.rel (%p2079) target = $region68
        $region67: #{tpu_custom_call.1} parent=47 // pred_region
          %s2083 = ssub.s32 128, 128
          %2084 = vsyncadd %s2075, %s2083
          %s2085 = smul.addr %s26, 128
          %s2086 = scalar_lea.hbm %s7, %s2085
          %s2088 = sshll.u32 %s2078, 4
          %s2089 = int_to_ptr.vmem [resolvable:$true] %s2088
          %2091 = dma.vmem_to_hbm [thread:$0]  %s2089, 128, %s2086, %s2075
        $region68: #{tpu_custom_call.1} parent=47 // pred_fallthru
          _
      $region48: #{tpu_custom_call.1} parent=5 // pred_fallthru
        _
      %p2092 = scmp.le.s32.totalorder 2, %s21
      // Predicated region
      $region69: #{tpu_custom_call.1} parent=5 // pred_check
        %p2093 = pneg %p2092
      $region70: #{tpu_custom_call.1} parent=5 // pred_check_branch
        %2095 = sbr.rel (%p2093) target = $region72
      $region71: #{tpu_custom_call.1} parent=5 // pred_region
        %s2096 = ssub.s32 %s21, 2
        // Predicated region
        $region73: #{tpu_custom_call.1} parent=71 // pred_check
          %p2097 = pneg %p202
        $region74: #{tpu_custom_call.1} parent=71 // pred_check_branch
          %2099 = sbr.rel (%p2097) target = $region76
        $region75: #{tpu_custom_call.1} parent=71 // pred_region
          %s2100 = sand.u32 %s187, 1
          %s2101 = scalar_lea.sflag [#allocation4], %s2100
          %s2102 = sand.u32 %s187, 1
          %s2103 = smul.addr %s2102, 8
          %s2104 = scalar_lea.vmem [#allocation10], %s2103
          %2105 = dma.done %s2101, 128
        $region76: #{tpu_custom_call.1} parent=71 // pred_fallthru
          _
      $region72: #{tpu_custom_call.1} parent=5 // pred_fallthru
        _
    $region6: #{tpu_custom_call.1} parent=1 // loop_footer
      %s25 = sadd.s32 1, %s21
    $region7: #{tpu_custom_call.1} parent=1 // loop_footer_branch
      %20 = sbr.rel target = $region3
    $region8: #{tpu_custom_call.1} parent=1 // loop_exit
      _
    %2106 = vsyncpa [#allocation3], 1
    %s2107 = scalar_lea.sflag [#allocation3], 1
    %2108 = vsyncpa %s2107, 1
    %2109 = vsyncpa [#allocation6], 1
    %2110 = vsyncpa [#allocation9], 1
    %2111 = vsyncpa [#allocation4], 1
    %s2112 = scalar_lea.sflag [#allocation4], 1
    %2113 = vsyncpa %s2112, 1

</llo_original>
